<compile_context>
chip_gen: v6e
topology: v6e:2x2x1
jax: 0.10.0
libtpu: 0.0.40
codegen_flags: <defaults>
</compile_context>

<pallas_src>
import functools

import jax
import jax.numpy as jnp
from jax import lax
from jax.experimental import pallas as pl
from jax.experimental.pallas import tpu as pltpu

_LANE = 128
# Sentinel distance for padded output lanes: >> any real distance (real dist <= 2) and >> any
# threshold.  Padded lanes are sliced off in the wrapper; the sentinel only exists so the stored
# block is fully defined.
_PAD_DIST = 1.0e9


# ----------------------------------------------------------------------------
# shared in-kernel helper: mutual nearest-neighbour match matrix from a distance
# matrix (exactly nn_matcher_distmat semantics, incl. first-index argmin on ties)
# ----------------------------------------------------------------------------
def _mutual_nn_match(dist, thresh):
    m, n = dist.shape
    col_ids = lax.broadcasted_iota(jnp.int32, (m, n), 1)
    row_ids = lax.broadcasted_iota(jnp.int32, (m, n), 0)
    row_min = jnp.min(dist, axis=1, keepdims=True)          # min over columns, per row
    col_min = jnp.min(dist, axis=0, keepdims=True)          # min over rows, per column
    # first-index argmin along each row / column (ties -> smallest index, like np.argmin)
    nn0 = jnp.min(jnp.where(dist == row_min, col_ids, n), axis=1, keepdims=True)  # [m, 1]
    nn1 = jnp.min(jnp.where(dist == col_min, row_ids, m), axis=0, keepdims=True)  # [1, n]
    # match[i, j] = 1  iff  j == argmin_j dist[i, :]  and  i == argmin_i dist[:, j]
    #               and dist[i, j] < thresh   (mutual NN + threshold)
    mutual = (col_ids == nn0) & (row_ids == nn1)
    return (mutual & (dist < thresh)).astype(jnp.float32)


# ----------------------------------------------------------------------------
# fused kernel: point matcher + line matcher in one launch
# ----------------------------------------------------------------------------
def _fused_matching_kernel(desc0_ref, desc1_ref, ldesc0_ref, ldesc1_ref, a0_ref, a1t_ref,
                           match_p_ref, dist_p_ref, match_l_ref, dist_l_ref,
                           *, thresh_p, thresh_l):
    # contract the channel dim of both operands: lhsᵀ @ rhs (transposed LHS is MXU-native)
    tn = (((0,), (0,)), ((), ()))

    n1 = desc1_ref.shape[1]   # real (unpadded) column count of the point outputs
    k1 = a1t_ref.shape[1]     # real (unpadded) column count of the line outputs

    # ---------------- point matcher (nn_matcher) ----------------
    sim_p = lax.dot_general(desc0_ref[...], desc1_ref[...], dimension_numbers=tn,
                            preferred_element_type=jnp.float32)            # [N0, N1]
    dist_p = jnp.sqrt(2.0 - 2.0 * jnp.clip(sim_p, -1.0, 1.0))
    match_p = _mutual_nn_match(dist_p, thresh_p)
    # lane-pad at store time: full-width (unmasked vst) background store, then overwrite the
    # real extent.  No HBM-side padding of the inputs is needed.
    dist_p_ref[...] = jnp.full(dist_p_ref.shape, _PAD_DIST, jnp.float32)
    match_p_ref[...] = jnp.zeros(match_p_ref.shape, jnp.float32)
    dist_p_ref[:, :n1] = dist_p
    match_p_ref[:, :n1] = match_p

    # ------- line matcher (get_dist_matrix -> subline2keyline -> nn_matcher_distmat) -------
    sim_l = lax.dot_general(ldesc0_ref[...], ldesc1_ref[...], dimension_numbers=tn,
                            preferred_element_type=jnp.float32)            # [S0, S1]
    dist_sub = jnp.sqrt(2.0 - 2.0 * jnp.clip(sim_l, -1.0, 1.0))
    tmp = jnp.dot(a0_ref[...], dist_sub, preferred_element_type=jnp.float32)       # [K0, S1]
    # A1 arrives pre-transposed ([S1, K1]) -> canonical contraction, no rhs transpose needed.
    dist_kl = jnp.dot(tmp, a1t_ref[...], preferred_element_type=jnp.float32)       # [K0, K1]
    match_l = _mutual_nn_match(dist_kl, thresh_l)
    dist_l_ref[...] = jnp.full(dist_l_ref.shape, _PAD_DIST, jnp.float32)
    match_l_ref[...] = jnp.zeros(match_l_ref.shape, jnp.float32)
    dist_l_ref[:, :k1] = dist_kl
    match_l_ref[:, :k1] = match_l


# ----------------------------------------------------------------------------
# wrapper: run fused kernel (lane-dense outputs), slice back to real extents
# ----------------------------------------------------------------------------
@functools.partial(jax.jit, static_argnames=("nn_thresh_p", "nn_thresh_l"))
def matching_forward(desc0, desc1, ldesc0, ldesc1, mat_kl2sub0, mat_kl2sub1, *,
                     nn_thresh_p, nn_thresh_l):
    """desc*: [D, N*] point descriptors, ldesc*: [D, S*] sub-line descriptors,
    mat_kl2sub*: [K*, S*] keyline->subline assignment.  Returns
    (matches_p [N0,N1], matching_scores_p [N0,N1], matches_l [K0,K1], matching_scores_l [K0,K1])."""
    desc0 = jnp.asarray(desc0, jnp.float32)
    desc1 = jnp.asarray(desc1, jnp.float32)
    ldesc0 = jnp.asarray(ldesc0, jnp.float32)
    ldesc1 = jnp.asarray(ldesc1, jnp.float32)
    a0 = jnp.asarray(mat_kl2sub0, jnp.float32)                  # [K0, S0]
    a1_t = jnp.asarray(mat_kl2sub1, jnp.float32).T              # [S1, K1] (pre-transposed, tiny)

    d, n0 = desc0.shape
    n1 = desc1.shape[1]
    s0 = ldesc0.shape[1]
    s1 = ldesc1.shape[1]
    k0 = a0.shape[0]
    k1 = a1_t.shape[1]

    # lane-dense output widths (padding happens inside the kernel at store time)
    n1p = _LANE * pl.cdiv(n1, _LANE)
    k1p = _LANE * pl.cdiv(k1, _LANE)

    kern = functools.partial(_fused_matching_kernel,
                             thresh_p=float(nn_thresh_p), thresh_l=float(nn_thresh_l))

    # Advisory cost estimate: lets XLA overlap this latency-bound call with adjacent work when
    # it lives inside a larger jit (e.g. right after the SuperPoint / LineTR heads).
    flops = 2 * (n0 * n1 * d + s0 * s1 * d + k0 * s0 * s1 + k0 * s1 * k1)
    transcendentals = n0 * n1 + s0 * s1          # sqrt
    bytes_accessed = 4 * (desc0.size + desc1.size + ldesc0.size + ldesc1.size
                          + a0.size + a1_t.size
                          + 2 * n0 * n1p + 2 * k0 * k1p)
    cost = pl.CostEstimate(flops=int(flops), transcendentals=int(transcendentals),
                           bytes_accessed=int(bytes_accessed))

    vmem = pl.BlockSpec(memory_space=pltpu.MemorySpace.VMEM)
    match_p, dist_p, match_l, dist_l = pl.pallas_call(
        kern,
        out_shape=(
            jax.ShapeDtypeStruct((n0, n1p), jnp.float32),
            jax.ShapeDtypeStruct((n0, n1p), jnp.float32),
            jax.ShapeDtypeStruct((k0, k1p), jnp.float32),
            jax.ShapeDtypeStruct((k0, k1p), jnp.float32),
        ),
        in_specs=[vmem] * 6,
        out_specs=(vmem, vmem, vmem, vmem),
        cost_estimate=cost,
    )(desc0, desc1, ldesc0, ldesc1, a0, a1_t)

    return (match_p[:, :n1], dist_p[:, :n1], match_l[:, :k1], dist_l[:, :k1])


# ----------------------------------------------------------------------------
# pure-JAX reference (same math) for a correctness check
# ----------------------------------------------------------------------------
def _ref_mutual_nn(dist, thresh):
    m, n = dist.shape
    nn0 = jnp.argmin(dist, axis=1)
    nn1 = jnp.argmin(dist, axis=0)
    row_hit = jnp.arange(n)[None, :] == nn0[:, None]
    col_hit = jnp.arange(m)[:, None] == nn1[None, :]
    return (row_hit & col_hit & (dist < thresh)).astype(jnp.float32)


def _ref_point_dist(desc0, desc1):
    sim = jnp.matmul(desc0.T, desc1, precision=lax.Precision.HIGHEST)
    return jnp.sqrt(2.0 - 2.0 * jnp.clip(sim, -1.0, 1.0))


def _ref_line_dist(ldesc0, ldesc1, a0, a1):
    sim = jnp.matmul(ldesc0.T, ldesc1, precision=lax.Precision.HIGHEST)
    dist_sub = jnp.sqrt(2.0 - 2.0 * jnp.clip(sim, -1.0, 1.0))
    return jnp.matmul(jnp.matmul(a0, dist_sub, precision=lax.Precision.HIGHEST),
                      a1.T, precision=lax.Precision.HIGHEST)


# ----------------------------------------------------------------------------
if __name__ == "__main__":
    key = jax.random.PRNGKey(0)
    ka, kb, kc, kd = jax.random.split(key, 4)

    D = 256           # SuperPoint / LineTR descriptor dim
    N0, N1 = 64, 64   # keypoints per image
    S0, S1 = 16, 16   # sub-lines per image
    KL0, KL1 = 8, 8   # key-lines per image (2 sub-lines each)

    def _l2norm(x, axis=0):
        return x / (jnp.linalg.norm(x, axis=axis, keepdims=True) + 1e-8)

    # synthetic (deterministic) descriptors, L2-normalized along the channel dim
    desc0 = _l2norm(jax.random.normal(ka, (D, N0), jnp.float32))
    desc1 = _l2norm(jax.random.normal(kb, (D, N1), jnp.float32))
    ldesc0 = _l2norm(jax.random.normal(kc, (D, S0), jnp.float32))
    ldesc1 = _l2norm(jax.random.normal(kd, (D, S1), jnp.float32))

    # klines -> sublines averaging matrices (each keyline owns 2 consecutive sublines)
    mat_kl2sub0 = jnp.repeat(jnp.eye(KL0, dtype=jnp.float32), S0 // KL0, axis=1) * (KL0 / S0)
    mat_kl2sub1 = jnp.repeat(jnp.eye(KL1, dtype=jnp.float32), S1 // KL1, axis=1) * (KL1 / S1)

    nn_threshold_p = 0.7   # superpoint.config['nn_threshold']
    nn_threshold_l = 0.8   # linetransformer.config['nn_threshold']

    matches_p, scores_p, matches_l, scores_l = matching_forward(
        desc0, desc1, ldesc0, ldesc1, mat_kl2sub0, mat_kl2sub1,
        nn_thresh_p=nn_threshold_p, nn_thresh_l=nn_threshold_l)
    jax.block_until_ready((matches_p, scores_p, matches_l, scores_l))

    # --- correctness checks ---
    # 1) distance matrices vs. a high-precision pure-JAX reference (loose atol so the check is
    #    independent of the exact MXU f32-decomposition used inside the kernel)
    rsp = _ref_point_dist(desc0, desc1)
    rsl = _ref_line_dist(ldesc0, ldesc1, mat_kl2sub0, mat_kl2sub1)
    assert jnp.allclose(scores_p, rsp, atol=2e-3), "point dist mismatch"
    assert jnp.allclose(scores_l, rsl, atol=2e-3), "line dist mismatch"
    # 2) mutual-NN + threshold logic checked exactly, on the kernel's own distance matrices
    #    (precision-regime independent, exercises the argmin / tie-break / threshold path)
    assert jnp.array_equal(matches_p, _ref_mutual_nn(scores_p, nn_threshold_p)), "point match mismatch"
    assert jnp.array_equal(matches_l, _ref_mutual_nn(scores_l, nn_threshold_l)), "line match mismatch"

    print("KERNEL_OK")
</pallas_src>

<mosaic_0001>
module attributes {stable_mosaic.version = 11 : i64} {
  func.func @_fused_matching_kernel(%arg0: memref<256x64xf32, #tpu.memory_space<vmem>>, %arg1: memref<256x64xf32, #tpu.memory_space<vmem>>, %arg2: memref<256x16xf32, #tpu.memory_space<vmem>>, %arg3: memref<256x16xf32, #tpu.memory_space<vmem>>, %arg4: memref<8x16xf32, #tpu.memory_space<vmem>>, %arg5: memref<16x8xf32, #tpu.memory_space<vmem>>, %arg6: memref<64x128xf32, #tpu.memory_space<vmem>>, %arg7: memref<64x128xf32, #tpu.memory_space<vmem>>, %arg8: memref<8x128xf32, #tpu.memory_space<vmem>>, %arg9: memref<8x128xf32, #tpu.memory_space<vmem>>) attributes {dimension_semantics = [], scalar_prefetch = 0 : i64, scratch_operands = 0 : i64, tpu.core_type = #tpu.core_type<tc>} {
    %c0 = arith.constant 0 : index
    %c0_0 = arith.constant 0 : index
    %0 = vector.load %arg0[%c0, %c0_0] : memref<256x64xf32, #tpu.memory_space<vmem>>, vector<256x64xf32>
    %c0_1 = arith.constant 0 : index
    %c0_2 = arith.constant 0 : index
    %1 = vector.load %arg1[%c0_1, %c0_2] : memref<256x64xf32, #tpu.memory_space<vmem>>, vector<256x64xf32>
    %cst = arith.constant dense<0.000000e+00> : vector<64x64xf32>
    %2 = tpu.matmul %0, %1, %cst {dimension_numbers = #tpu.dot_dimension_numbers<[0], [0], [1], [1], [0, 1, 1, 1], [], []>} : vector<256x64xf32>, vector<256x64xf32>, vector<64x64xf32> -> vector<64x64xf32>
    %cst_3 = arith.constant -1.000000e+00 : f32
    %cst_4 = arith.constant 1.000000e+00 : f32
    %3 = vector.broadcast %cst_3 : f32 to vector<64x64xf32>
    %4 = arith.maximumf %3, %2 : vector<64x64xf32>
    %5 = vector.broadcast %cst_4 : f32 to vector<64x64xf32>
    %6 = arith.minimumf %5, %4 : vector<64x64xf32>
    %cst_5 = arith.constant 2.000000e+00 : f32
    %7 = vector.broadcast %cst_5 : f32 to vector<64x64xf32>
    %8 = arith.mulf %7, %6 : vector<64x64xf32>
    %cst_6 = arith.constant 2.000000e+00 : f32
    %9 = vector.broadcast %cst_6 : f32 to vector<64x64xf32>
    %10 = arith.subf %9, %8 : vector<64x64xf32>
    %11 = math.sqrt %10 : vector<64x64xf32>
    %12 = tpu.iota {dimensions = array<i32: 1>} : vector<64x64xi32>
    %13 = tpu.iota {dimensions = array<i32: 0>} : vector<64x64xi32>
    %cst_7 = arith.constant dense<0x7F800000> : vector<64xf32>
    %14 = vector.multi_reduction <minimumf>, %11, %cst_7 [1] : vector<64x64xf32> to vector<64xf32>
    %15 = vector.shape_cast %14 : vector<64xf32> to vector<64x1xf32>
    %cst_8 = arith.constant dense<0x7F800000> : vector<64xf32>
    %16 = vector.multi_reduction <minimumf>, %11, %cst_8 [0] : vector<64x64xf32> to vector<64xf32>
    %17 = vector.shape_cast %16 : vector<64xf32> to vector<1x64xf32>
    %18 = vector.broadcast %15 : vector<64x1xf32> to vector<64x64xf32>
    %19 = arith.cmpf oeq, %11, %18 : vector<64x64xf32>
    %c64_i32 = arith.constant 64 : i32
    %20 = vector.broadcast %c64_i32 : i32 to vector<64x64xi32>
    %21 = arith.select %19, %12, %20 : vector<64x64xi1>, vector<64x64xi32>
    %cst_9 = arith.constant dense<2147483647> : vector<64xi32>
    %22 = vector.multi_reduction <minsi>, %21, %cst_9 [1] : vector<64x64xi32> to vector<64xi32>
    %23 = vector.shape_cast %22 : vector<64xi32> to vector<64x1xi32>
    %24 = vector.broadcast %17 : vector<1x64xf32> to vector<64x64xf32>
    %25 = arith.cmpf oeq, %11, %24 : vector<64x64xf32>
    %c64_i32_10 = arith.constant 64 : i32
    %26 = vector.broadcast %c64_i32_10 : i32 to vector<64x64xi32>
    %27 = arith.select %25, %13, %26 : vector<64x64xi1>, vector<64x64xi32>
    %cst_11 = arith.constant dense<2147483647> : vector<64xi32>
    %28 = vector.multi_reduction <minsi>, %27, %cst_11 [0] : vector<64x64xi32> to vector<64xi32>
    %29 = vector.shape_cast %28 : vector<64xi32> to vector<1x64xi32>
    %30 = vector.broadcast %23 : vector<64x1xi32> to vector<64x64xi32>
    %31 = arith.cmpi eq, %12, %30 : vector<64x64xi32>
    %32 = vector.broadcast %29 : vector<1x64xi32> to vector<64x64xi32>
    %33 = arith.cmpi eq, %13, %32 : vector<64x64xi32>
    %34 = arith.andi %31, %33 : vector<64x64xi1>
    %cst_12 = arith.constant 0.699999988 : f32
    %35 = vector.broadcast %cst_12 : f32 to vector<64x64xf32>
    %36 = arith.cmpf olt, %11, %35 : vector<64x64xf32>
    %37 = arith.andi %34, %36 : vector<64x64xi1>
    %38 = arith.extui %37 : vector<64x64xi1> to vector<64x64xi32>
    %39 = arith.sitofp %38 : vector<64x64xi32> to vector<64x64xf32>
    %cst_13 = arith.constant 1.000000e+09 : f32
    %40 = vector.broadcast %cst_13 : f32 to vector<64x128xf32>
    %c0_14 = arith.constant 0 : index
    %c0_15 = arith.constant 0 : index
    %41 = vector.load %arg7[%c0_14, %c0_15] : memref<64x128xf32, #tpu.memory_space<vmem>>, vector<64x128xf32>
    tpu.vector_store %arg7[%c0_14, %c0_15], %40 {strides = array<i32>} : memref<64x128xf32, #tpu.memory_space<vmem>>, vector<64x128xf32>,
    %cst_16 = arith.constant 0.000000e+00 : f32
    %42 = vector.broadcast %cst_16 : f32 to vector<64x128xf32>
    %c0_17 = arith.constant 0 : index
    %c0_18 = arith.constant 0 : index
    %43 = vector.load %arg6[%c0_17, %c0_18] : memref<64x128xf32, #tpu.memory_space<vmem>>, vector<64x128xf32>
    tpu.vector_store %arg6[%c0_17, %c0_18], %42 {strides = array<i32>} : memref<64x128xf32, #tpu.memory_space<vmem>>, vector<64x128xf32>,
    %c0_19 = arith.constant 0 : index
    %c0_20 = arith.constant 0 : index
    %44 = vector.load %arg7[%c0_19, %c0_20] : memref<64x128xf32, #tpu.memory_space<vmem>>, vector<64x64xf32>
    tpu.vector_store %arg7[%c0_19, %c0_20], %11 {strides = array<i32>} : memref<64x128xf32, #tpu.memory_space<vmem>>, vector<64x64xf32>,
    %c0_21 = arith.constant 0 : index
    %c0_22 = arith.constant 0 : index
    %45 = vector.load %arg6[%c0_21, %c0_22] : memref<64x128xf32, #tpu.memory_space<vmem>>, vector<64x64xf32>
    tpu.vector_store %arg6[%c0_21, %c0_22], %39 {strides = array<i32>} : memref<64x128xf32, #tpu.memory_space<vmem>>, vector<64x64xf32>,
    %c0_23 = arith.constant 0 : index
    %c0_24 = arith.constant 0 : index
    %46 = vector.load %arg2[%c0_23, %c0_24] : memref<256x16xf32, #tpu.memory_space<vmem>>, vector<256x16xf32>
    %c0_25 = arith.constant 0 : index
    %c0_26 = arith.constant 0 : index
    %47 = vector.load %arg3[%c0_25, %c0_26] : memref<256x16xf32, #tpu.memory_space<vmem>>, vector<256x16xf32>
    %cst_27 = arith.constant dense<0.000000e+00> : vector<16x16xf32>
    %48 = tpu.matmul %46, %47, %cst_27 {dimension_numbers = #tpu.dot_dimension_numbers<[0], [0], [1], [1], [0, 1, 1, 1], [], []>} : vector<256x16xf32>, vector<256x16xf32>, vector<16x16xf32> -> vector<16x16xf32>
    %cst_28 = arith.constant -1.000000e+00 : f32
    %cst_29 = arith.constant 1.000000e+00 : f32
    %49 = vector.broadcast %cst_28 : f32 to vector<16x16xf32>
    %50 = arith.maximumf %49, %48 : vector<16x16xf32>
    %51 = vector.broadcast %cst_29 : f32 to vector<16x16xf32>
    %52 = arith.minimumf %51, %50 : vector<16x16xf32>
    %cst_30 = arith.constant 2.000000e+00 : f32
    %53 = vector.broadcast %cst_30 : f32 to vector<16x16xf32>
    %54 = arith.mulf %53, %52 : vector<16x16xf32>
    %cst_31 = arith.constant 2.000000e+00 : f32
    %55 = vector.broadcast %cst_31 : f32 to vector<16x16xf32>
    %56 = arith.subf %55, %54 : vector<16x16xf32>
    %57 = math.sqrt %56 : vector<16x16xf32>
    %c0_32 = arith.constant 0 : index
    %c0_33 = arith.constant 0 : index
    %58 = vector.load %arg4[%c0_32, %c0_33] : memref<8x16xf32, #tpu.memory_space<vmem>>, vector<8x16xf32>
    %cst_34 = arith.constant dense<0.000000e+00> : vector<8x16xf32>
    %59 = tpu.matmul %58, %57, %cst_34 {dimension_numbers = #tpu.dot_dimension_numbers<[1], [0], [0], [1], [0, 0, 1, 1], [], []>} : vector<8x16xf32>, vector<16x16xf32>, vector<8x16xf32> -> vector<8x16xf32>
    %c0_35 = arith.constant 0 : index
    %c0_36 = arith.constant 0 : index
    %60 = vector.load %arg5[%c0_35, %c0_36] : memref<16x8xf32, #tpu.memory_space<vmem>>, vector<16x8xf32>
    %cst_37 = arith.constant dense<0.000000e+00> : vector<8x8xf32>
    %61 = tpu.matmul %59, %60, %cst_37 {dimension_numbers = #tpu.dot_dimension_numbers<[1], [0], [0], [1], [0, 0, 1, 1], [], []>} : vector<8x16xf32>, vector<16x8xf32>, vector<8x8xf32> -> vector<8x8xf32>
    %62 = tpu.iota {dimensions = array<i32: 1>} : vector<8x8xi32>
    %63 = tpu.iota {dimensions = array<i32: 0>} : vector<8x8xi32>
    %cst_38 = arith.constant dense<0x7F800000> : vector<8xf32>
    %64 = vector.multi_reduction <minimumf>, %61, %cst_38 [1] : vector<8x8xf32> to vector<8xf32>
    %65 = vector.shape_cast %64 : vector<8xf32> to vector<8x1xf32>
    %cst_39 = arith.constant dense<0x7F800000> : vector<8xf32>
    %66 = vector.multi_reduction <minimumf>, %61, %cst_39 [0] : vector<8x8xf32> to vector<8xf32>
    %67 = vector.shape_cast %66 : vector<8xf32> to vector<1x8xf32>
    %68 = vector.broadcast %65 : vector<8x1xf32> to vector<8x8xf32>
    %69 = arith.cmpf oeq, %61, %68 : vector<8x8xf32>
    %c8_i32 = arith.constant 8 : i32
    %70 = vector.broadcast %c8_i32 : i32 to vector<8x8xi32>
    %71 = arith.select %69, %62, %70 : vector<8x8xi1>, vector<8x8xi32>
    %cst_40 = arith.constant dense<2147483647> : vector<8xi32>
    %72 = vector.multi_reduction <minsi>, %71, %cst_40 [1] : vector<8x8xi32> to vector<8xi32>
    %73 = vector.shape_cast %72 : vector<8xi32> to vector<8x1xi32>
    %74 = vector.broadcast %67 : vector<1x8xf32> to vector<8x8xf32>
    %75 = arith.cmpf oeq, %61, %74 : vector<8x8xf32>
    %c8_i32_41 = arith.constant 8 : i32
    %76 = vector.broadcast %c8_i32_41 : i32 to vector<8x8xi32>
    %77 = arith.select %75, %63, %76 : vector<8x8xi1>, vector<8x8xi32>
    %cst_42 = arith.constant dense<2147483647> : vector<8xi32>
    %78 = vector.multi_reduction <minsi>, %77, %cst_42 [0] : vector<8x8xi32> to vector<8xi32>
    %79 = vector.shape_cast %78 : vector<8xi32> to vector<1x8xi32>
    %80 = vector.broadcast %73 : vector<8x1xi32> to vector<8x8xi32>
    %81 = arith.cmpi eq, %62, %80 : vector<8x8xi32>
    %82 = vector.broadcast %79 : vector<1x8xi32> to vector<8x8xi32>
    %83 = arith.cmpi eq, %63, %82 : vector<8x8xi32>
    %84 = arith.andi %81, %83 : vector<8x8xi1>
    %cst_43 = arith.constant 8.000000e-01 : f32
    %85 = vector.broadcast %cst_43 : f32 to vector<8x8xf32>
    %86 = arith.cmpf olt, %61, %85 : vector<8x8xf32>
    %87 = arith.andi %84, %86 : vector<8x8xi1>
    %88 = arith.extui %87 : vector<8x8xi1> to vector<8x8xi32>
    %89 = arith.sitofp %88 : vector<8x8xi32> to vector<8x8xf32>
    %cst_44 = arith.constant 1.000000e+09 : f32
    %90 = vector.broadcast %cst_44 : f32 to vector<8x128xf32>
    %c0_45 = arith.constant 0 : index
    %c0_46 = arith.constant 0 : index
    %91 = vector.load %arg9[%c0_45, %c0_46] : memref<8x128xf32, #tpu.memory_space<vmem>>, vector<8x128xf32>
    tpu.vector_store %arg9[%c0_45, %c0_46], %90 {strides = array<i32>} : memref<8x128xf32, #tpu.memory_space<vmem>>, vector<8x128xf32>,
    %cst_47 = arith.constant 0.000000e+00 : f32
    %92 = vector.broadcast %cst_47 : f32 to vector<8x128xf32>
    %c0_48 = arith.constant 0 : index
    %c0_49 = arith.constant 0 : index
    %93 = vector.load %arg8[%c0_48, %c0_49] : memref<8x128xf32, #tpu.memory_space<vmem>>, vector<8x128xf32>
    tpu.vector_store %arg8[%c0_48, %c0_49], %92 {strides = array<i32>} : memref<8x128xf32, #tpu.memory_space<vmem>>, vector<8x128xf32>,
    %c0_50 = arith.constant 0 : index
    %c0_51 = arith.constant 0 : index
    %94 = vector.load %arg9[%c0_50, %c0_51] : memref<8x128xf32, #tpu.memory_space<vmem>>, vector<8x8xf32>
    tpu.vector_store %arg9[%c0_50, %c0_51], %61 {strides = array<i32>} : memref<8x128xf32, #tpu.memory_space<vmem>>, vector<8x8xf32>,
    %c0_52 = arith.constant 0 : index
    %c0_53 = arith.constant 0 : index
    %95 = vector.load %arg8[%c0_52, %c0_53] : memref<8x128xf32, #tpu.memory_space<vmem>>, vector<8x8xf32>
    tpu.vector_store %arg8[%c0_52, %c0_53], %89 {strides = array<i32>} : memref<8x128xf32, #tpu.memory_space<vmem>>, vector<8x8xf32>,
    return
  }
}

</mosaic_0001>

<llo_original>
// kernel: matching_forward.1
$region0: #{matching_forward.1}
  #allocation0 [shape = 'u32[]', space=smem, size = 0x4, offset = 0x4, fixed_abs, tag = 'smem constant byte address 0x4 - core index']
  #allocation1 [shape = 'u32[144,128]{1,0:T(1,128)}', space=vmem, size = 0x12000, scoped, tag = 'internal scratch']
  %s0 = inlined_call_operand.vmem [shape: f32[256,64], index: 0, kind: input, shape index: {}]
  %s1 = inlined_call_operand.vmem [shape: f32[256,64], index: 1, kind: input, shape index: {}]
  %s2 = inlined_call_operand.vmem [shape: f32[256,16], index: 2, kind: input, shape index: {}]
  %s3 = inlined_call_operand.vmem [shape: f32[256,16], index: 3, kind: input, shape index: {}]
  %s4 = inlined_call_operand.vmem [shape: f32[8,16], index: 4, kind: input, shape index: {}]
  %s5 = inlined_call_operand.vmem [shape: f32[16,8], index: 5, kind: input, shape index: {}]
  %s6 = inlined_call_operand.hbm [shape: f32[64,128], index: 6, kind: output, shape index: {0}]
  %s7 = inlined_call_operand.hbm [shape: f32[64,128], index: 7, kind: output, shape index: {1}]
  %s8 = inlined_call_operand.hbm [shape: f32[8,128], index: 8, kind: output, shape index: {2}]
  %s9 = inlined_call_operand.hbm [shape: f32[8,128], index: 9, kind: output, shape index: {3}]
  %10 = xla_tuple %s6, %s7, %s8, %s9
  %s11 = sld [smem:[#allocation0]]
  $region58: #{matching_forward.1} parent=0
    _
  %s13 = ssub.s32 1, %s11
  %s14 = scalar_select 0, %s13, %s11
  $region1: #{matching_forward.1} parent=0
    #allocation2 [shape = 'u8[32768]{0}', space=vmem, size = 0x8000, scoped, tag = 'output window, operand 0, single buffered']
    #allocation3 [shape = 's32[1]{0}', space=sflag, size = 0x4, scoped, tag = 'scoped memory for matching_forward.1']
    #allocation4 [shape = 'u8[32768]{0}', space=vmem, size = 0x8000, scoped, tag = 'output window, operand 1, single buffered']
    #allocation5 [shape = 's32[1]{0}', space=sflag, size = 0x4, scoped, tag = 'scoped memory for matching_forward.1']
    #allocation6 [shape = 'u8[4096]{0}', space=vmem, size = 0x1000, scoped, tag = 'output window, operand 2, single buffered']
    #allocation7 [shape = 'u8[4096]{0}', space=vmem, size = 0x1000, scoped, tag = 'output window, operand 3, single buffered']
    #allocation8 [shape = 's32[1]{0}', space=sflag, size = 0x4, scoped, tag = 'scoped memory for matching_forward.1']
    %15 = vsyncpa [#allocation3], 0
    %16 = vsyncpa [#allocation5], 0
    %17 = vsyncpa [#allocation8], 0
    // Predicated region
    $region2: #{matching_forward.1} parent=1 // pred_check
      _
    $region3: #{matching_forward.1} parent=1 // pred_check_branch
      %19 = sbr.rel (0) target = $region5
    $region4: #{matching_forward.1} parent=1 // pred_region
      _
    $region5: #{matching_forward.1} parent=1 // pred_fallthru
      _
    // Predicated region
    $region6: #{matching_forward.1} parent=1 // pred_check
      _
    $region7: #{matching_forward.1} parent=1 // pred_check_branch
      %21 = sbr.rel (0) target = $region9
    $region8: #{matching_forward.1} parent=1 // pred_region
      _
    $region9: #{matching_forward.1} parent=1 // pred_fallthru
      _
    // Predicated region
    $region10: #{matching_forward.1} parent=1 // pred_check
      _
    $region11: #{matching_forward.1} parent=1 // pred_check_branch
      %23 = sbr.rel (0) target = $region13
    $region12: #{matching_forward.1} parent=1 // pred_region
      _
    $region13: #{matching_forward.1} parent=1 // pred_fallthru
      _
    // Predicated region
    $region14: #{matching_forward.1} parent=1 // pred_check
      _
    $region15: #{matching_forward.1} parent=1 // pred_check_branch
      %25 = sbr.rel (0) target = $region17
    $region16: #{matching_forward.1} parent=1 // pred_region
      _
    $region17: #{matching_forward.1} parent=1 // pred_fallthru
      _
    // Predicated region
    $region18: #{matching_forward.1} parent=1 // pred_check
      _
    $region19: #{matching_forward.1} parent=1 // pred_check_branch
      %27 = sbr.rel (0) target = $region21
    $region20: #{matching_forward.1} parent=1 // pred_region
      _
    $region21: #{matching_forward.1} parent=1 // pred_fallthru
      _
    // Predicated region
    $region22: #{matching_forward.1} parent=1 // pred_check
      _
    $region23: #{matching_forward.1} parent=1 // pred_check_branch
      %29 = sbr.rel (0) target = $region25
    $region24: #{matching_forward.1} parent=1 // pred_region
      _
    $region25: #{matching_forward.1} parent=1 // pred_fallthru
      _
    %v30 = vld [vmem:[%s0] sm:$0xff]
    %v31 = vld [vmem:[%s0 + $0x8] sm:$0xff]
    %v32 = vld [vmem:[%s0 + $0x10] sm:$0xff]
    %v33 = vld [vmem:[%s0 + $0x18] sm:$0xff]
    %v34 = vld [vmem:[%s0 + $0x20] sm:$0xff]
    %v35 = vld [vmem:[%s0 + $0x28] sm:$0xff]
    %v36 = vld [vmem:[%s0 + $0x30] sm:$0xff]
    %v37 = vld [vmem:[%s0 + $0x38] sm:$0xff]
    %v38 = vld [vmem:[%s0 + $0x40] sm:$0xff]
    %v39 = vld [vmem:[%s0 + $0x48] sm:$0xff]
    %v40 = vld [vmem:[%s0 + $0x50] sm:$0xff]
    %v41 = vld [vmem:[%s0 + $0x58] sm:$0xff]
    %v42 = vld [vmem:[%s0 + $0x60] sm:$0xff]
    %v43 = vld [vmem:[%s0 + $0x68] sm:$0xff]
    %v44 = vld [vmem:[%s0 + $0x70] sm:$0xff]
    %v45 = vld [vmem:[%s0 + $0x78] sm:$0xff]
    %v46 = vld [vmem:[%s0 + $0x80] sm:$0xff]
    %v47 = vld [vmem:[%s0 + $0x88] sm:$0xff]
    %v48 = vld [vmem:[%s0 + $0x90] sm:$0xff]
    %v49 = vld [vmem:[%s0 + $0x98] sm:$0xff]
    %v50 = vld [vmem:[%s0 + $0xa0] sm:$0xff]
    %v51 = vld [vmem:[%s0 + $0xa8] sm:$0xff]
    %v52 = vld [vmem:[%s0 + $0xb0] sm:$0xff]
    %v53 = vld [vmem:[%s0 + $0xb8] sm:$0xff]
    %v54 = vld [vmem:[%s0 + $0xc0] sm:$0xff]
    %v55 = vld [vmem:[%s0 + $0xc8] sm:$0xff]
    %v56 = vld [vmem:[%s0 + $0xd0] sm:$0xff]
    %v57 = vld [vmem:[%s0 + $0xd8] sm:$0xff]
    %v58 = vld [vmem:[%s0 + $0xe0] sm:$0xff]
    %v59 = vld [vmem:[%s0 + $0xe8] sm:$0xff]
    %v60 = vld [vmem:[%s0 + $0xf0] sm:$0xff]
    %v61 = vld [vmem:[%s0 + $0xf8] sm:$0xff]
    %v62 = vld [vmem:[%s1] sm:$0xff]
    %v63 = vld [vmem:[%s1 + $0x8] sm:$0xff]
    %v64 = vld [vmem:[%s1 + $0x10] sm:$0xff]
    %v65 = vld [vmem:[%s1 + $0x18] sm:$0xff]
    %v66 = vld [vmem:[%s1 + $0x20] sm:$0xff]
    %v67 = vld [vmem:[%s1 + $0x28] sm:$0xff]
    %v68 = vld [vmem:[%s1 + $0x30] sm:$0xff]
    %v69 = vld [vmem:[%s1 + $0x38] sm:$0xff]
    %v70 = vld [vmem:[%s1 + $0x40] sm:$0xff]
    %v71 = vld [vmem:[%s1 + $0x48] sm:$0xff]
    %v72 = vld [vmem:[%s1 + $0x50] sm:$0xff]
    %v73 = vld [vmem:[%s1 + $0x58] sm:$0xff]
    %v74 = vld [vmem:[%s1 + $0x60] sm:$0xff]
    %v75 = vld [vmem:[%s1 + $0x68] sm:$0xff]
    %v76 = vld [vmem:[%s1 + $0x70] sm:$0xff]
    %v77 = vld [vmem:[%s1 + $0x78] sm:$0xff]
    %v78 = vld [vmem:[%s1 + $0x80] sm:$0xff]
    %v79 = vld [vmem:[%s1 + $0x88] sm:$0xff]
    %v80 = vld [vmem:[%s1 + $0x90] sm:$0xff]
    %v81 = vld [vmem:[%s1 + $0x98] sm:$0xff]
    %v82 = vld [vmem:[%s1 + $0xa0] sm:$0xff]
    %v83 = vld [vmem:[%s1 + $0xa8] sm:$0xff]
    %v84 = vld [vmem:[%s1 + $0xb0] sm:$0xff]
    %v85 = vld [vmem:[%s1 + $0xb8] sm:$0xff]
    %v86 = vld [vmem:[%s1 + $0xc0] sm:$0xff]
    %v87 = vld [vmem:[%s1 + $0xc8] sm:$0xff]
    %v88 = vld [vmem:[%s1 + $0xd0] sm:$0xff]
    %v89 = vld [vmem:[%s1 + $0xd8] sm:$0xff]
    %v90 = vld [vmem:[%s1 + $0xe0] sm:$0xff]
    %v91 = vld [vmem:[%s1 + $0xe8] sm:$0xff]
    %v92 = vld [vmem:[%s1 + $0xf0] sm:$0xff]
    %v93 = vld [vmem:[%s1 + $0xf8] sm:$0xff]
    %94 = vxpose.xlu0.b32.start [1/16] %v30, 128
    %95 = vxpose.xlu0.b32.cont [2/16] %v31, 128
    %96 = vxpose.xlu0.b32.cont [3/16] %v32, 128
    %97 = vxpose.xlu0.b32.cont [4/16] %v33, 128
    %98 = vxpose.xlu0.b32.cont [5/16] %v34, 128
    %99 = vxpose.xlu0.b32.cont [6/16] %v35, 128
    %100 = vxpose.xlu0.b32.cont [7/16] %v36, 128
    %101 = vxpose.xlu0.b32.cont [8/16] %v37, 128
    %102 = vxpose.xlu0.b32.cont [9/16] %v38, 128
    %103 = vxpose.xlu0.b32.cont [10/16] %v39, 128
    %104 = vxpose.xlu0.b32.cont [11/16] %v40, 128
    %105 = vxpose.xlu0.b32.cont [12/16] %v41, 128
    %106 = vxpose.xlu0.b32.cont [13/16] %v42, 128
    %107 = vxpose.xlu0.b32.cont [14/16] %v43, 128
    %108 = vxpose.xlu0.b32.cont [15/16] %v44, 128
    %109 = vxpose.xlu0.b32.end [16/16] %v45, 128
    %v110 = vpop.trf.xlu0
    %v111 = vpop.trf.xlu0
    %v112 = vpop.trf.xlu0
    %v113 = vpop.trf.xlu0
    %v114 = vpop.trf.xlu0
    %v115 = vpop.trf.xlu0
    %v116 = vpop.trf.xlu0
    %v117 = vpop.trf.xlu0
    %v118 = vpop.trf.xlu0
    %v119 = vpop.trf.xlu0
    %v120 = vpop.trf.xlu0
    %v121 = vpop.trf.xlu0
    %v122 = vpop.trf.xlu0
    %v123 = vpop.trf.xlu0
    %v124 = vpop.trf.xlu0
    %v125 = vpop.trf.xlu0
    %126 = vxpose.xlu0.b32.start [1/16] %v46, 128
    %127 = vxpose.xlu0.b32.cont [2/16] %v47, 128
    %128 = vxpose.xlu0.b32.cont [3/16] %v48, 128
    %129 = vxpose.xlu0.b32.cont [4/16] %v49, 128
    %130 = vxpose.xlu0.b32.cont [5/16] %v50, 128
    %131 = vxpose.xlu0.b32.cont [6/16] %v51, 128
    %132 = vxpose.xlu0.b32.cont [7/16] %v52, 128
    %133 = vxpose.xlu0.b32.cont [8/16] %v53, 128
    %134 = vxpose.xlu0.b32.cont [9/16] %v54, 128
    %135 = vxpose.xlu0.b32.cont [10/16] %v55, 128
    %136 = vxpose.xlu0.b32.cont [11/16] %v56, 128
    %137 = vxpose.xlu0.b32.cont [12/16] %v57, 128
    %138 = vxpose.xlu0.b32.cont [13/16] %v58, 128
    %139 = vxpose.xlu0.b32.cont [14/16] %v59, 128
    %140 = vxpose.xlu0.b32.cont [15/16] %v60, 128
    %141 = vxpose.xlu0.b32.end [16/16] %v61, 128
    %v142 = vpop.trf.xlu0
    %v143 = vpop.trf.xlu0
    %v144 = vpop.trf.xlu0
    %v145 = vpop.trf.xlu0
    %v146 = vpop.trf.xlu0
    %v147 = vpop.trf.xlu0
    %v148 = vpop.trf.xlu0
    %v149 = vpop.trf.xlu0
    %v150 = vpop.trf.xlu0
    %v151 = vpop.trf.xlu0
    %v152 = vpop.trf.xlu0
    %v153 = vpop.trf.xlu0
    %v154 = vpop.trf.xlu0
    %v155 = vpop.trf.xlu0
    %v156 = vpop.trf.xlu0
    %v157 = vpop.trf.xlu0
    %158 = vmatprep.subr.mxu0 0.0
    %159 = vmatpush1.msra.mxu0 %v77
    %160 = vmatprep.subr.mxu0 0.0
    %161 = vmatpush1.msra.mxu0 %v76
    %162 = vmatprep.subr.mxu0 0.0
    %163 = vmatpush1.msra.mxu0 %v75
    %164 = vmatprep.subr.mxu0 0.0
    %165 = vmatpush1.msra.mxu0 %v74
    %166 = vmatprep.subr.mxu0 0.0
    %167 = vmatpush1.msra.mxu0 %v73
    %168 = vmatprep.subr.mxu0 0.0
    %169 = vmatpush1.msra.mxu0 %v72
    %170 = vmatprep.subr.mxu0 0.0
    %171 = vmatpush1.msra.mxu0 %v71
    %172 = vmatprep.subr.mxu0 0.0
    %173 = vmatpush1.msra.mxu0 %v70
    %174 = vmatprep.subr.mxu0 0.0
    %175 = vmatpush1.msra.mxu0 %v69
    %176 = vmatprep.subr.mxu0 0.0
    %177 = vmatpush1.msra.mxu0 %v68
    %178 = vmatprep.subr.mxu0 0.0
    %179 = vmatpush1.msra.mxu0 %v67
    %180 = vmatprep.subr.mxu0 0.0
    %181 = vmatpush1.msra.mxu0 %v66
    %182 = vmatprep.subr.mxu0 0.0
    %183 = vmatpush1.msra.mxu0 %v65
    %184 = vmatprep.subr.mxu0 0.0
    %185 = vmatpush1.msra.mxu0 %v64
    %186 = vmatprep.subr.mxu0 0.0
    %187 = vmatpush1.msra.mxu0 %v63
    %188 = vmatprep.subr.mxu0 0.0
    %189 = vmatpush1.msra.mxu0 %v62
    %190 = vmatprep.subr.mxu0 0.0
    %191 = vmatpush2.msra.mxu0 %v93
    %192 = vmatprep.subr.mxu0 0.0
    %193 = vmatpush2.msra.mxu0 %v92
    %194 = vmatprep.subr.mxu0 0.0
    %195 = vmatpush2.msra.mxu0 %v91
    %196 = vmatprep.subr.mxu0 0.0
    %197 = vmatpush2.msra.mxu0 %v90
    %198 = vmatprep.subr.mxu0 0.0
    %199 = vmatpush2.msra.mxu0 %v89
    %200 = vmatprep.subr.mxu0 0.0
    %201 = vmatpush2.msra.mxu0 %v88
    %202 = vmatprep.subr.mxu0 0.0
    %203 = vmatpush2.msra.mxu0 %v87
    %204 = vmatprep.subr.mxu0 0.0
    %205 = vmatpush2.msra.mxu0 %v86
    %206 = vmatprep.subr.mxu0 0.0
    %207 = vmatpush2.msra.mxu0 %v85
    %208 = vmatprep.subr.mxu0 0.0
    %209 = vmatpush2.msra.mxu0 %v84
    %210 = vmatprep.subr.mxu0 0.0
    %211 = vmatpush2.msra.mxu0 %v83
    %212 = vmatprep.subr.mxu0 0.0
    %213 = vmatpush2.msra.mxu0 %v82
    %214 = vmatprep.subr.mxu0 0.0
    %215 = vmatpush2.msra.mxu0 %v81
    %216 = vmatprep.subr.mxu0 0.0
    %217 = vmatpush2.msra.mxu0 %v80
    %218 = vmatprep.subr.mxu0 0.0
    %219 = vmatpush2.msra.mxu0 %v79
    %220 = vmatprep.subr.mxu0 0.0
    %221 = vmatpush2.msra.mxu0 %v78
    %222 = vmatprep.mubr.f32.mxu0 %v142
    %223 = vmatmul.mubr.f32.gmra.mxu0 %v110
    %v224 = vpop.f32.mrf.mxu0
    %v225 = vadd.f32 0.0, %v224
    %v226 = vpop.f32.mrf.mxu0
    %227 = vmatprep.mubr.f32.mxu0 %v143
    %228 = vmatmul.mubr.f32.gmra.mxu0 %v111
    %v229 = vpop.f32.mrf.mxu0
    %v230 = vadd.f32 0.0, %v229
    %v231 = vpop.f32.mrf.mxu0
    %232 = vmatprep.mubr.f32.mxu0 %v144
    %233 = vmatmul.mubr.f32.gmra.mxu0 %v112
    %v234 = vpop.f32.mrf.mxu0
    %v235 = vadd.f32 0.0, %v234
    %v236 = vpop.f32.mrf.mxu0
    %237 = vmatprep.mubr.f32.mxu0 %v145
    %238 = vmatmul.mubr.f32.gmra.mxu0 %v113
    %v239 = vpop.f32.mrf.mxu0
    %v240 = vadd.f32 0.0, %v239
    %v241 = vpop.f32.mrf.mxu0
    %242 = vmatprep.mubr.f32.mxu0 %v146
    %243 = vmatmul.mubr.f32.gmra.mxu0 %v114
    %v244 = vpop.f32.mrf.mxu0
    %v245 = vadd.f32 0.0, %v244
    %v246 = vpop.f32.mrf.mxu0
    %247 = vmatprep.mubr.f32.mxu0 %v147
    %248 = vmatmul.mubr.f32.gmra.mxu0 %v115
    %v249 = vpop.f32.mrf.mxu0
    %v250 = vadd.f32 0.0, %v249
    %v251 = vpop.f32.mrf.mxu0
    %252 = vmatprep.mubr.f32.mxu0 %v148
    %253 = vmatmul.mubr.f32.gmra.mxu0 %v116
    %v254 = vpop.f32.mrf.mxu0
    %v255 = vadd.f32 0.0, %v254
    %v256 = vpop.f32.mrf.mxu0
    %257 = vmatprep.mubr.f32.mxu0 %v149
    %258 = vmatmul.mubr.f32.gmra.mxu0 %v117
    %v259 = vpop.f32.mrf.mxu0
    %v260 = vadd.f32 0.0, %v259
    %v261 = vpop.f32.mrf.mxu0
    %262 = vdwg.mxu0
    %v263 = vmax.f32 %v225, -1.0
    %v264 = vmax.f32 %v230, -1.0
    %v265 = vmax.f32 %v235, -1.0
    %v266 = vmax.f32 %v240, -1.0
    %v267 = vmax.f32 %v245, -1.0
    %v268 = vmax.f32 %v250, -1.0
    %v269 = vmax.f32 %v255, -1.0
    %v270 = vmax.f32 %v260, -1.0
    %v271 = vmin.f32 %v263, 1.0
    %v272 = vmin.f32 %v264, 1.0
    %v273 = vmin.f32 %v265, 1.0
    %v274 = vmin.f32 %v266, 1.0
    %v275 = vmin.f32 %v267, 1.0
    %v276 = vmin.f32 %v268, 1.0
    %v277 = vmin.f32 %v269, 1.0
    %v278 = vmin.f32 %v270, 1.0
    %v279 = vmul.f32 %v271, 2.0
    %v280 = vmul.f32 %v272, 2.0
    %v281 = vmul.f32 %v273, 2.0
    %v282 = vmul.f32 %v274, 2.0
    %v283 = vmul.f32 %v275, 2.0
    %v284 = vmul.f32 %v276, 2.0
    %v285 = vmul.f32 %v277, 2.0
    %v286 = vmul.f32 %v278, 2.0
    %v287 = vsub.f32 2.0, %v279
    %v288 = vsub.f32 2.0, %v280
    %v289 = vsub.f32 2.0, %v281
    %v290 = vsub.f32 2.0, %v282
    %v291 = vsub.f32 2.0, %v283
    %v292 = vsub.f32 2.0, %v284
    %v293 = vsub.f32 2.0, %v285
    %v294 = vsub.f32 2.0, %v286
    %v295 = vrsqrt.pop %v287
    %v296 = vmul.f32 %v287, %v295
    %vm297 = vcmp.eq.f32.partialorder %v287, inf
    %v298 = vsel %vm297, %v287, %v296
    %vm299 = vcmp.eq.f32.partialorder %v287, 0.0
    %v300 = vand.u32 %v287, 2147483648
    %v301 = vsel %vm299, %v300, %v298
    %v302 = vrsqrt.pop %v288
    %v303 = vmul.f32 %v288, %v302
    %vm304 = vcmp.eq.f32.partialorder %v288, inf
    %v305 = vsel %vm304, %v288, %v303
    %vm306 = vcmp.eq.f32.partialorder %v288, 0.0
    %v307 = vand.u32 %v288, 2147483648
    %v308 = vsel %vm306, %v307, %v305
    %v309 = vrsqrt.pop %v289
    %v310 = vmul.f32 %v289, %v309
    %vm311 = vcmp.eq.f32.partialorder %v289, inf
    %v312 = vsel %vm311, %v289, %v310
    %vm313 = vcmp.eq.f32.partialorder %v289, 0.0
    %v314 = vand.u32 %v289, 2147483648
    %v315 = vsel %vm313, %v314, %v312
    %v316 = vrsqrt.pop %v290
    %v317 = vmul.f32 %v290, %v316
    %vm318 = vcmp.eq.f32.partialorder %v290, inf
    %v319 = vsel %vm318, %v290, %v317
    %vm320 = vcmp.eq.f32.partialorder %v290, 0.0
    %v321 = vand.u32 %v290, 2147483648
    %v322 = vsel %vm320, %v321, %v319
    %v323 = vrsqrt.pop %v291
    %v324 = vmul.f32 %v291, %v323
    %vm325 = vcmp.eq.f32.partialorder %v291, inf
    %v326 = vsel %vm325, %v291, %v324
    %vm327 = vcmp.eq.f32.partialorder %v291, 0.0
    %v328 = vand.u32 %v291, 2147483648
    %v329 = vsel %vm327, %v328, %v326
    %v330 = vrsqrt.pop %v292
    %v331 = vmul.f32 %v292, %v330
    %vm332 = vcmp.eq.f32.partialorder %v292, inf
    %v333 = vsel %vm332, %v292, %v331
    %vm334 = vcmp.eq.f32.partialorder %v292, 0.0
    %v335 = vand.u32 %v292, 2147483648
    %v336 = vsel %vm334, %v335, %v333
    %v337 = vrsqrt.pop %v293
    %v338 = vmul.f32 %v293, %v337
    %vm339 = vcmp.eq.f32.partialorder %v293, inf
    %v340 = vsel %vm339, %v293, %v338
    %vm341 = vcmp.eq.f32.partialorder %v293, 0.0
    %v342 = vand.u32 %v293, 2147483648
    %v343 = vsel %vm341, %v342, %v340
    %v344 = vrsqrt.pop %v294
    %v345 = vmul.f32 %v294, %v344
    %vm346 = vcmp.eq.f32.partialorder %v294, inf
    %v347 = vsel %vm346, %v294, %v345
    %vm348 = vcmp.eq.f32.partialorder %v294, 0.0
    %v349 = vand.u32 %v294, 2147483648
    %v350 = vsel %vm348, %v349, %v347
    %v351 = vlaneseq
    %v352 = vand.u32 %v351, 127
    %v353 = vlaneseq
    %v354 = vshrl.u32 %v353, 7
    %v355 = vadd.s32 %v354, 8
    %v356 = vadd.s32 %v354, 16
    %v357 = vadd.s32 %v354, 24
    %v358 = vadd.s32 %v354, 32
    %v359 = vadd.s32 %v354, 40
    %v360 = vadd.s32 %v354, 48
    %v361 = vadd.s32 %v354, 56
    %vm362 = vcmask 523264
    %v363 = vsel %vm362, %v301, inf
    %364 = vmin.xlane.f32.xlu0 %v363
    %v365 = vpop.xlane.xlu0 %364
    %v366 = vsel %vm362, %v308, inf
    %367 = vmin.xlane.f32.xlu0 %v366
    %v368 = vpop.xlane.xlu0 %367
    %v369 = vsel %vm362, %v315, inf
    %370 = vmin.xlane.f32.xlu0 %v369
    %v371 = vpop.xlane.xlu0 %370
    %v372 = vsel %vm362, %v322, inf
    %373 = vmin.xlane.f32.xlu0 %v372
    %v374 = vpop.xlane.xlu0 %373
    %v375 = vsel %vm362, %v329, inf
    %376 = vmin.xlane.f32.xlu0 %v375
    %v377 = vpop.xlane.xlu0 %376
    %v378 = vsel %vm362, %v336, inf
    %379 = vmin.xlane.f32.xlu0 %v378
    %v380 = vpop.xlane.xlu0 %379
    %v381 = vsel %vm362, %v343, inf
    %382 = vmin.xlane.f32.xlu0 %v381
    %v383 = vpop.xlane.xlu0 %382
    %v384 = vsel %vm362, %v350, inf
    %385 = vmin.xlane.f32.xlu0 %v384
    %v386 = vpop.xlane.xlu0 %385
    %v387 = vmin.f32 %v363, %v375
    %v388 = vmin.f32 %v366, %v378
    %v389 = vmin.f32 %v369, %v381
    %v390 = vmin.f32 %v372, %v384
    %v391 = vmin.f32 %v387, %v388
    %v392 = vmin.f32 %v389, %v390
    %v393 = vmin.f32 %v391, %v392
    %v394 = vrot.slane %v393, 4
    %v395 = vmin.f32 %v393, %v394
    %v396 = vrot.slane %v395, 2
    %v397 = vmin.f32 %v395, %v396
    %v398 = vrot.slane %v397, 1
    %v399 = vmin.f32 %v397, %v398
    %vm400 = vcmp.eq.f32.partialorder %v301, %v365
    %vm401 = vcmp.eq.f32.partialorder %v308, %v368
    %vm402 = vcmp.eq.f32.partialorder %v315, %v371
    %vm403 = vcmp.eq.f32.partialorder %v322, %v374
    %vm404 = vcmp.eq.f32.partialorder %v329, %v377
    %vm405 = vcmp.eq.f32.partialorder %v336, %v380
    %vm406 = vcmp.eq.f32.partialorder %v343, %v383
    %vm407 = vcmp.eq.f32.partialorder %v350, %v386
    %v408 = vsel %vm400, %v352, 64
    %v409 = vsel %vm401, %v352, 64
    %v410 = vsel %vm402, %v352, 64
    %v411 = vsel %vm403, %v352, 64
    %v412 = vsel %vm404, %v352, 64
    %v413 = vsel %vm405, %v352, 64
    %v414 = vsel %vm406, %v352, 64
    %v415 = vsel %vm407, %v352, 64
    %v416 = vsel %vm362, %v408, 2147483647
    %v417 = vand.u32 %v416, 65535
    %v418 = vshra.s32 %v416, 16
    %v419 = vcvt.s32.f32 %v417
    %v420 = vcvt.s32.f32 %v418
    %421 = vmin.xlane.f32.xlu0 %v420
    %v422 = vpop.xlane.xlu0 %421
    %vm423 = vcmp.eq.f32.partialorder %v420, %v422
    %v424 = vsel %vm423, %v419, inf
    %425 = vmin.xlane.f32.xlu0 %v424
    %v426 = vpop.xlane.xlu0 %425
    %v427 = vcvt.f32.s32 %v426
    %v428 = vcvt.f32.s32 %v422
    %v429 = vshll.u32 %v428, 16
    %v430 = vadd.s32 %v429, %v427
    %v431 = vsel %vm362, %v409, 2147483647
    %v432 = vand.u32 %v431, 65535
    %v433 = vshra.s32 %v431, 16
    %v434 = vcvt.s32.f32 %v432
    %v435 = vcvt.s32.f32 %v433
    %436 = vmin.xlane.f32.xlu0 %v435
    %v437 = vpop.xlane.xlu0 %436
    %vm438 = vcmp.eq.f32.partialorder %v435, %v437
    %v439 = vsel %vm438, %v434, inf
    %440 = vmin.xlane.f32.xlu0 %v439
    %v441 = vpop.xlane.xlu0 %440
    %v442 = vcvt.f32.s32 %v441
    %v443 = vcvt.f32.s32 %v437
    %v444 = vshll.u32 %v443, 16
    %v445 = vadd.s32 %v444, %v442
    %v446 = vsel %vm362, %v410, 2147483647
    %v447 = vand.u32 %v446, 65535
    %v448 = vshra.s32 %v446, 16
    %v449 = vcvt.s32.f32 %v447
    %v450 = vcvt.s32.f32 %v448
    %451 = vmin.xlane.f32.xlu0 %v450
    %v452 = vpop.xlane.xlu0 %451
    %vm453 = vcmp.eq.f32.partialorder %v450, %v452
    %v454 = vsel %vm453, %v449, inf
    %455 = vmin.xlane.f32.xlu0 %v454
    %v456 = vpop.xlane.xlu0 %455
    %v457 = vcvt.f32.s32 %v456
    %v458 = vcvt.f32.s32 %v452
    %v459 = vshll.u32 %v458, 16
    %v460 = vadd.s32 %v459, %v457
    %v461 = vsel %vm362, %v411, 2147483647
    %v462 = vand.u32 %v461, 65535
    %v463 = vshra.s32 %v461, 16
    %v464 = vcvt.s32.f32 %v462
    %v465 = vcvt.s32.f32 %v463
    %466 = vmin.xlane.f32.xlu0 %v465
    %v467 = vpop.xlane.xlu0 %466
    %vm468 = vcmp.eq.f32.partialorder %v465, %v467
    %v469 = vsel %vm468, %v464, inf
    %470 = vmin.xlane.f32.xlu0 %v469
    %v471 = vpop.xlane.xlu0 %470
    %v472 = vcvt.f32.s32 %v471
    %v473 = vcvt.f32.s32 %v467
    %v474 = vshll.u32 %v473, 16
    %v475 = vadd.s32 %v474, %v472
    %v476 = vsel %vm362, %v412, 2147483647
    %v477 = vand.u32 %v476, 65535
    %v478 = vshra.s32 %v476, 16
    %v479 = vcvt.s32.f32 %v477
    %v480 = vcvt.s32.f32 %v478
    %481 = vmin.xlane.f32.xlu0 %v480
    %v482 = vpop.xlane.xlu0 %481
    %vm483 = vcmp.eq.f32.partialorder %v480, %v482
    %v484 = vsel %vm483, %v479, inf
    %485 = vmin.xlane.f32.xlu0 %v484
    %v486 = vpop.xlane.xlu0 %485
    %v487 = vcvt.f32.s32 %v486
    %v488 = vcvt.f32.s32 %v482
    %v489 = vshll.u32 %v488, 16
    %v490 = vadd.s32 %v489, %v487
    %v491 = vsel %vm362, %v413, 2147483647
    %v492 = vand.u32 %v491, 65535
    %v493 = vshra.s32 %v491, 16
    %v494 = vcvt.s32.f32 %v492
    %v495 = vcvt.s32.f32 %v493
    %496 = vmin.xlane.f32.xlu0 %v495
    %v497 = vpop.xlane.xlu0 %496
    %vm498 = vcmp.eq.f32.partialorder %v495, %v497
    %v499 = vsel %vm498, %v494, inf
    %500 = vmin.xlane.f32.xlu0 %v499
    %v501 = vpop.xlane.xlu0 %500
    %v502 = vcvt.f32.s32 %v501
    %v503 = vcvt.f32.s32 %v497
    %v504 = vshll.u32 %v503, 16
    %v505 = vadd.s32 %v504, %v502
    %v506 = vsel %vm362, %v414, 2147483647
    %v507 = vand.u32 %v506, 65535
    %v508 = vshra.s32 %v506, 16
    %v509 = vcvt.s32.f32 %v507
    %v510 = vcvt.s32.f32 %v508
    %511 = vmin.xlane.f32.xlu0 %v510
    %v512 = vpop.xlane.xlu0 %511
    %vm513 = vcmp.eq.f32.partialorder %v510, %v512
    %v514 = vsel %vm513, %v509, inf
    %515 = vmin.xlane.f32.xlu0 %v514
    %v516 = vpop.xlane.xlu0 %515
    %v517 = vcvt.f32.s32 %v516
    %v518 = vcvt.f32.s32 %v512
    %v519 = vshll.u32 %v518, 16
    %v520 = vadd.s32 %v519, %v517
    %v521 = vsel %vm362, %v415, 2147483647
    %v522 = vand.u32 %v521, 65535
    %v523 = vshra.s32 %v521, 16
    %v524 = vcvt.s32.f32 %v522
    %v525 = vcvt.s32.f32 %v523
    %526 = vmin.xlane.f32.xlu0 %v525
    %v527 = vpop.xlane.xlu0 %526
    %vm528 = vcmp.eq.f32.partialorder %v525, %v527
    %v529 = vsel %vm528, %v524, inf
    %530 = vmin.xlane.f32.xlu0 %v529
    %v531 = vpop.xlane.xlu0 %530
    %v532 = vcvt.f32.s32 %v531
    %v533 = vcvt.f32.s32 %v527
    %v534 = vshll.u32 %v533, 16
    %v535 = vadd.s32 %v534, %v532
    %vm536 = vcmp.eq.f32.partialorder %v301, %v399
    %vm537 = vcmp.eq.f32.partialorder %v308, %v399
    %vm538 = vcmp.eq.f32.partialorder %v315, %v399
    %vm539 = vcmp.eq.f32.partialorder %v322, %v399
    %vm540 = vcmp.eq.f32.partialorder %v329, %v399
    %vm541 = vcmp.eq.f32.partialorder %v336, %v399
    %vm542 = vcmp.eq.f32.partialorder %v343, %v399
    %vm543 = vcmp.eq.f32.partialorder %v350, %v399
    %v544 = vsel %vm536, %v354, 64
    %v545 = vsel %vm537, %v355, 64
    %v546 = vsel %vm538, %v356, 64
    %v547 = vsel %vm539, %v357, 64
    %v548 = vsel %vm540, %v358, 64
    %v549 = vsel %vm541, %v359, 64
    %v550 = vsel %vm542, %v360, 64
    %v551 = vsel %vm543, %v361, 64
    %v552 = vsel %vm362, %v544, 2147483647
    %v553 = vsel %vm362, %v545, 2147483647
    %v554 = vsel %vm362, %v546, 2147483647
    %v555 = vsel %vm362, %v547, 2147483647
    %v556 = vsel %vm362, %v548, 2147483647
    %vm557 = vcmp.lt.s32.totalorder %v552, %v556
    %v558 = vsel %vm557, %v552, %v556
    %v559 = vsel %vm362, %v549, 2147483647
    %vm560 = vcmp.lt.s32.totalorder %v553, %v559
    %v561 = vsel %vm560, %v553, %v559
    %v562 = vsel %vm362, %v550, 2147483647
    %vm563 = vcmp.lt.s32.totalorder %v554, %v562
    %v564 = vsel %vm563, %v554, %v562
    %v565 = vsel %vm362, %v551, 2147483647
    %vm566 = vcmp.lt.s32.totalorder %v555, %v565
    %v567 = vsel %vm566, %v555, %v565
    %vm568 = vcmp.lt.s32.totalorder %v558, %v561
    %v569 = vsel %vm568, %v558, %v561
    %vm570 = vcmp.lt.s32.totalorder %v564, %v567
    %v571 = vsel %vm570, %v564, %v567
    %vm572 = vcmp.lt.s32.totalorder %v569, %v571
    %v573 = vsel %vm572, %v569, %v571
    %v574 = vrot.slane %v573, 4
    %vm575 = vcmp.lt.s32.totalorder %v573, %v574
    %v576 = vsel %vm575, %v573, %v574
    %v577 = vrot.slane %v576, 2
    %vm578 = vcmp.lt.s32.totalorder %v576, %v577
    %v579 = vsel %vm578, %v576, %v577
    %v580 = vrot.slane %v579, 1
    %vm581 = vcmp.lt.s32.totalorder %v579, %v580
    %v582 = vsel %vm581, %v579, %v580
    %vm583 = vcmp.eq.s32.totalorder %v352, %v430
    %vm584 = vcmp.eq.s32.totalorder %v352, %v445
    %vm585 = vcmp.eq.s32.totalorder %v352, %v460
    %vm586 = vcmp.eq.s32.totalorder %v352, %v475
    %vm587 = vcmp.eq.s32.totalorder %v352, %v490
    %vm588 = vcmp.eq.s32.totalorder %v352, %v505
    %vm589 = vcmp.eq.s32.totalorder %v352, %v520
    %vm590 = vcmp.eq.s32.totalorder %v352, %v535
    %vm591 = vcmp.eq.s32.totalorder %v354, %v582
    %vm592 = vcmp.eq.s32.totalorder %v355, %v582
    %vm593 = vcmp.eq.s32.totalorder %v356, %v582
    %vm594 = vcmp.eq.s32.totalorder %v357, %v582
    %vm595 = vcmp.eq.s32.totalorder %v358, %v582
    %vm596 = vcmp.eq.s32.totalorder %v359, %v582
    %vm597 = vcmp.eq.s32.totalorder %v360, %v582
    %vm598 = vcmp.eq.s32.totalorder %v361, %v582
    %vm599 = vmand %vm583, %vm591
    %vm600 = vmand %vm584, %vm592
    %vm601 = vmand %vm585, %vm593
    %vm602 = vmand %vm586, %vm594
    %vm603 = vmand %vm587, %vm595
    %vm604 = vmand %vm588, %vm596
    %vm605 = vmand %vm589, %vm597
    %vm606 = vmand %vm590, %vm598
    %vm607 = vcmp.lt.f32.partialorder %v301, 0.7
    %vm608 = vcmp.lt.f32.partialorder %v308, 0.7
    %vm609 = vcmp.lt.f32.partialorder %v315, 0.7
    %vm610 = vcmp.lt.f32.partialorder %v322, 0.7
    %vm611 = vcmp.lt.f32.partialorder %v329, 0.7
    %vm612 = vcmp.lt.f32.partialorder %v336, 0.7
    %vm613 = vcmp.lt.f32.partialorder %v343, 0.7
    %vm614 = vcmp.lt.f32.partialorder %v350, 0.7
    %vm615 = vmand %vm599, %vm607
    %vm616 = vmand %vm600, %vm608
    %vm617 = vmand %vm601, %vm609
    %vm618 = vmand %vm602, %vm610
    %vm619 = vmand %vm603, %vm611
    %vm620 = vmand %vm604, %vm612
    %vm621 = vmand %vm605, %vm613
    %vm622 = vmand %vm606, %vm614
    %v623 = vsel %vm615, 1, 0
    %v624 = vsel %vm616, 1, 0
    %v625 = vsel %vm617, 1, 0
    %v626 = vsel %vm618, 1, 0
    %v627 = vsel %vm619, 1, 0
    %v628 = vsel %vm620, 1, 0
    %v629 = vsel %vm621, 1, 0
    %v630 = vsel %vm622, 1, 0
    %v631 = vcvt.s32.f32 %v623
    %v632 = vcvt.s32.f32 %v624
    %v633 = vcvt.s32.f32 %v625
    %v634 = vcvt.s32.f32 %v626
    %v635 = vcvt.s32.f32 %v627
    %v636 = vcvt.s32.f32 %v628
    %v637 = vcvt.s32.f32 %v629
    %v638 = vcvt.s32.f32 %v630
    %639 = vst [vmem:[#allocation4] sm:$0xff] 1e+09
    %640 = vst [vmem:[#allocation4 + $0x8] sm:$0xff] 1e+09
    %641 = vst [vmem:[#allocation4 + $0x10] sm:$0xff] 1e+09
    %642 = vst [vmem:[#allocation4 + $0x18] sm:$0xff] 1e+09
    %643 = vst [vmem:[#allocation4 + $0x20] sm:$0xff] 1e+09
    %644 = vst [vmem:[#allocation4 + $0x28] sm:$0xff] 1e+09
    %645 = vst [vmem:[#allocation4 + $0x30] sm:$0xff] 1e+09
    %646 = vst [vmem:[#allocation4 + $0x38] sm:$0xff] 1e+09
    %647 = vst [vmem:[#allocation2] sm:$0xff] 0.0
    %648 = vst [vmem:[#allocation2 + $0x8] sm:$0xff] 0.0
    %649 = vst [vmem:[#allocation2 + $0x10] sm:$0xff] 0.0
    %650 = vst [vmem:[#allocation2 + $0x18] sm:$0xff] 0.0
    %651 = vst [vmem:[#allocation2 + $0x20] sm:$0xff] 0.0
    %652 = vst [vmem:[#allocation2 + $0x28] sm:$0xff] 0.0
    %653 = vst [vmem:[#allocation2 + $0x30] sm:$0xff] 0.0
    %654 = vst [vmem:[#allocation2 + $0x38] sm:$0xff] 0.0
    %655 = vst.msk [vmem:[#allocation4] sm:$0xff] %vm362, %v301
    %656 = vst.msk [vmem:[#allocation4 + $0x8] sm:$0xff] %vm362, %v308
    %657 = vst.msk [vmem:[#allocation4 + $0x10] sm:$0xff] %vm362, %v315
    %658 = vst.msk [vmem:[#allocation4 + $0x18] sm:$0xff] %vm362, %v322
    %659 = vst.msk [vmem:[#allocation4 + $0x20] sm:$0xff] %vm362, %v329
    %660 = vst.msk [vmem:[#allocation4 + $0x28] sm:$0xff] %vm362, %v336
    %661 = vst.msk [vmem:[#allocation4 + $0x30] sm:$0xff] %vm362, %v343
    %662 = vst.msk [vmem:[#allocation4 + $0x38] sm:$0xff] %vm362, %v350
    %663 = vst.msk [vmem:[#allocation2] sm:$0xff] %vm362, %v631
    %664 = vst.msk [vmem:[#allocation2 + $0x8] sm:$0xff] %vm362, %v632
    %665 = vst.msk [vmem:[#allocation2 + $0x10] sm:$0xff] %vm362, %v633
    %666 = vst.msk [vmem:[#allocation2 + $0x18] sm:$0xff] %vm362, %v634
    %667 = vst.msk [vmem:[#allocation2 + $0x20] sm:$0xff] %vm362, %v635
    %668 = vst.msk [vmem:[#allocation2 + $0x28] sm:$0xff] %vm362, %v636
    %669 = vst.msk [vmem:[#allocation2 + $0x30] sm:$0xff] %vm362, %v637
    %670 = vst.msk [vmem:[#allocation2 + $0x38] sm:$0xff] %vm362, %v638
    %v671 = vld [vmem:[%s2] sm:$0xff]
    %v672 = vld [vmem:[%s2 + $0x8] sm:$0xff]
    %v673 = vld [vmem:[%s2 + $0x10] sm:$0xff]
    %v674 = vld [vmem:[%s2 + $0x18] sm:$0xff]
    %v675 = vld [vmem:[%s2 + $0x20] sm:$0xff]
    %v676 = vld [vmem:[%s2 + $0x28] sm:$0xff]
    %v677 = vld [vmem:[%s2 + $0x30] sm:$0xff]
    %v678 = vld [vmem:[%s2 + $0x38] sm:$0xff]
    %v679 = vld [vmem:[%s2 + $0x40] sm:$0xff]
    %v680 = vld [vmem:[%s2 + $0x48] sm:$0xff]
    %v681 = vld [vmem:[%s2 + $0x50] sm:$0xff]
    %v682 = vld [vmem:[%s2 + $0x58] sm:$0xff]
    %v683 = vld [vmem:[%s2 + $0x60] sm:$0xff]
    %v684 = vld [vmem:[%s2 + $0x68] sm:$0xff]
    %v685 = vld [vmem:[%s2 + $0x70] sm:$0xff]
    %v686 = vld [vmem:[%s2 + $0x78] sm:$0xff]
    %v687 = vld [vmem:[%s2 + $0x80] sm:$0xff]
    %v688 = vld [vmem:[%s2 + $0x88] sm:$0xff]
    %v689 = vld [vmem:[%s2 + $0x90] sm:$0xff]
    %v690 = vld [vmem:[%s2 + $0x98] sm:$0xff]
    %v691 = vld [vmem:[%s2 + $0xa0] sm:$0xff]
    %v692 = vld [vmem:[%s2 + $0xa8] sm:$0xff]
    %v693 = vld [vmem:[%s2 + $0xb0] sm:$0xff]
    %v694 = vld [vmem:[%s2 + $0xb8] sm:$0xff]
    %v695 = vld [vmem:[%s2 + $0xc0] sm:$0xff]
    %v696 = vld [vmem:[%s2 + $0xc8] sm:$0xff]
    %v697 = vld [vmem:[%s2 + $0xd0] sm:$0xff]
    %v698 = vld [vmem:[%s2 + $0xd8] sm:$0xff]
    %v699 = vld [vmem:[%s2 + $0xe0] sm:$0xff]
    %v700 = vld [vmem:[%s2 + $0xe8] sm:$0xff]
    %v701 = vld [vmem:[%s2 + $0xf0] sm:$0xff]
    %v702 = vld [vmem:[%s2 + $0xf8] sm:$0xff]
    %v703 = vld [vmem:[%s3] sm:$0xff]
    %v704 = vld [vmem:[%s3 + $0x8] sm:$0xff]
    %v705 = vld [vmem:[%s3 + $0x10] sm:$0xff]
    %v706 = vld [vmem:[%s3 + $0x18] sm:$0xff]
    %v707 = vld [vmem:[%s3 + $0x20] sm:$0xff]
    %v708 = vld [vmem:[%s3 + $0x28] sm:$0xff]
    %v709 = vld [vmem:[%s3 + $0x30] sm:$0xff]
    %v710 = vld [vmem:[%s3 + $0x38] sm:$0xff]
    %v711 = vld [vmem:[%s3 + $0x40] sm:$0xff]
    %v712 = vld [vmem:[%s3 + $0x48] sm:$0xff]
    %v713 = vld [vmem:[%s3 + $0x50] sm:$0xff]
    %v714 = vld [vmem:[%s3 + $0x58] sm:$0xff]
    %v715 = vld [vmem:[%s3 + $0x60] sm:$0xff]
    %v716 = vld [vmem:[%s3 + $0x68] sm:$0xff]
    %v717 = vld [vmem:[%s3 + $0x70] sm:$0xff]
    %v718 = vld [vmem:[%s3 + $0x78] sm:$0xff]
    %v719 = vld [vmem:[%s3 + $0x80] sm:$0xff]
    %v720 = vld [vmem:[%s3 + $0x88] sm:$0xff]
    %v721 = vld [vmem:[%s3 + $0x90] sm:$0xff]
    %v722 = vld [vmem:[%s3 + $0x98] sm:$0xff]
    %v723 = vld [vmem:[%s3 + $0xa0] sm:$0xff]
    %v724 = vld [vmem:[%s3 + $0xa8] sm:$0xff]
    %v725 = vld [vmem:[%s3 + $0xb0] sm:$0xff]
    %v726 = vld [vmem:[%s3 + $0xb8] sm:$0xff]
    %v727 = vld [vmem:[%s3 + $0xc0] sm:$0xff]
    %v728 = vld [vmem:[%s3 + $0xc8] sm:$0xff]
    %v729 = vld [vmem:[%s3 + $0xd0] sm:$0xff]
    %v730 = vld [vmem:[%s3 + $0xd8] sm:$0xff]
    %v731 = vld [vmem:[%s3 + $0xe0] sm:$0xff]
    %v732 = vld [vmem:[%s3 + $0xe8] sm:$0xff]
    %v733 = vld [vmem:[%s3 + $0xf0] sm:$0xff]
    %v734 = vld [vmem:[%s3 + $0xf8] sm:$0xff]
    %735 = vxpose.xlu0.b32.start [1/16] %v671, 128
    %736 = vxpose.xlu0.b32.cont [2/16] %v672, 128
    %737 = vxpose.xlu0.b32.cont [3/16] %v673, 128
    %738 = vxpose.xlu0.b32.cont [4/16] %v674, 128
    %739 = vxpose.xlu0.b32.cont [5/16] %v675, 128
    %740 = vxpose.xlu0.b32.cont [6/16] %v676, 128
    %741 = vxpose.xlu0.b32.cont [7/16] %v677, 128
    %742 = vxpose.xlu0.b32.cont [8/16] %v678, 128
    %743 = vxpose.xlu0.b32.cont [9/16] %v679, 128
    %744 = vxpose.xlu0.b32.cont [10/16] %v680, 128
    %745 = vxpose.xlu0.b32.cont [11/16] %v681, 128
    %746 = vxpose.xlu0.b32.cont [12/16] %v682, 128
    %747 = vxpose.xlu0.b32.cont [13/16] %v683, 128
    %748 = vxpose.xlu0.b32.cont [14/16] %v684, 128
    %749 = vxpose.xlu0.b32.cont [15/16] %v685, 128
    %750 = vxpose.xlu0.b32.end [16/16] %v686, 128
    %v751 = vpop.trf.xlu0
    %v752 = vpop.trf.xlu0
    %v753 = vpop.trf.xlu0
    %v754 = vpop.trf.xlu0
    %v755 = vpop.trf.xlu0
    %v756 = vpop.trf.xlu0
    %v757 = vpop.trf.xlu0
    %v758 = vpop.trf.xlu0
    %v759 = vpop.trf.xlu0
    %v760 = vpop.trf.xlu0
    %v761 = vpop.trf.xlu0
    %v762 = vpop.trf.xlu0
    %v763 = vpop.trf.xlu0
    %v764 = vpop.trf.xlu0
    %v765 = vpop.trf.xlu0
    %v766 = vpop.trf.xlu0
    %767 = vxpose.xlu0.b32.start [1/16] %v687, 128
    %768 = vxpose.xlu0.b32.cont [2/16] %v688, 128
    %769 = vxpose.xlu0.b32.cont [3/16] %v689, 128
    %770 = vxpose.xlu0.b32.cont [4/16] %v690, 128
    %771 = vxpose.xlu0.b32.cont [5/16] %v691, 128
    %772 = vxpose.xlu0.b32.cont [6/16] %v692, 128
    %773 = vxpose.xlu0.b32.cont [7/16] %v693, 128
    %774 = vxpose.xlu0.b32.cont [8/16] %v694, 128
    %775 = vxpose.xlu0.b32.cont [9/16] %v695, 128
    %776 = vxpose.xlu0.b32.cont [10/16] %v696, 128
    %777 = vxpose.xlu0.b32.cont [11/16] %v697, 128
    %778 = vxpose.xlu0.b32.cont [12/16] %v698, 128
    %779 = vxpose.xlu0.b32.cont [13/16] %v699, 128
    %780 = vxpose.xlu0.b32.cont [14/16] %v700, 128
    %781 = vxpose.xlu0.b32.cont [15/16] %v701, 128
    %782 = vxpose.xlu0.b32.end [16/16] %v702, 128
    %v783 = vpop.trf.xlu0
    %v784 = vpop.trf.xlu0
    %v785 = vpop.trf.xlu0
    %v786 = vpop.trf.xlu0
    %v787 = vpop.trf.xlu0
    %v788 = vpop.trf.xlu0
    %v789 = vpop.trf.xlu0
    %v790 = vpop.trf.xlu0
    %v791 = vpop.trf.xlu0
    %v792 = vpop.trf.xlu0
    %v793 = vpop.trf.xlu0
    %v794 = vpop.trf.xlu0
    %v795 = vpop.trf.xlu0
    %v796 = vpop.trf.xlu0
    %v797 = vpop.trf.xlu0
    %v798 = vpop.trf.xlu0
    %799 = vmatprep.subr.mxu0 0.0
    %800 = vmatpush1.msra.mxu0 %v718
    %801 = vmatprep.subr.mxu0 0.0
    %802 = vmatpush1.msra.mxu0 %v717
    %803 = vmatprep.subr.mxu0 0.0
    %804 = vmatpush1.msra.mxu0 %v716
    %805 = vmatprep.subr.mxu0 0.0
    %806 = vmatpush1.msra.mxu0 %v715
    %807 = vmatprep.subr.mxu0 0.0
    %808 = vmatpush1.msra.mxu0 %v714
    %809 = vmatprep.subr.mxu0 0.0
    %810 = vmatpush1.msra.mxu0 %v713
    %811 = vmatprep.subr.mxu0 0.0
    %812 = vmatpush1.msra.mxu0 %v712
    %813 = vmatprep.subr.mxu0 0.0
    %814 = vmatpush1.msra.mxu0 %v711
    %815 = vmatprep.subr.mxu0 0.0
    %816 = vmatpush1.msra.mxu0 %v710
    %817 = vmatprep.subr.mxu0 0.0
    %818 = vmatpush1.msra.mxu0 %v709
    %819 = vmatprep.subr.mxu0 0.0
    %820 = vmatpush1.msra.mxu0 %v708
    %821 = vmatprep.subr.mxu0 0.0
    %822 = vmatpush1.msra.mxu0 %v707
    %823 = vmatprep.subr.mxu0 0.0
    %824 = vmatpush1.msra.mxu0 %v706
    %825 = vmatprep.subr.mxu0 0.0
    %826 = vmatpush1.msra.mxu0 %v705
    %827 = vmatprep.subr.mxu0 0.0
    %828 = vmatpush1.msra.mxu0 %v704
    %829 = vmatprep.subr.mxu0 0.0
    %830 = vmatpush1.msra.mxu0 %v703
    %831 = vmatprep.subr.mxu0 0.0
    %832 = vmatpush2.msra.mxu0 %v734
    %833 = vmatprep.subr.mxu0 0.0
    %834 = vmatpush2.msra.mxu0 %v733
    %835 = vmatprep.subr.mxu0 0.0
    %836 = vmatpush2.msra.mxu0 %v732
    %837 = vmatprep.subr.mxu0 0.0
    %838 = vmatpush2.msra.mxu0 %v731
    %839 = vmatprep.subr.mxu0 0.0
    %840 = vmatpush2.msra.mxu0 %v730
    %841 = vmatprep.subr.mxu0 0.0
    %842 = vmatpush2.msra.mxu0 %v729
    %843 = vmatprep.subr.mxu0 0.0
    %844 = vmatpush2.msra.mxu0 %v728
    %845 = vmatprep.subr.mxu0 0.0
    %846 = vmatpush2.msra.mxu0 %v727
    %847 = vmatprep.subr.mxu0 0.0
    %848 = vmatpush2.msra.mxu0 %v726
    %849 = vmatprep.subr.mxu0 0.0
    %850 = vmatpush2.msra.mxu0 %v725
    %851 = vmatprep.subr.mxu0 0.0
    %852 = vmatpush2.msra.mxu0 %v724
    %853 = vmatprep.subr.mxu0 0.0
    %854 = vmatpush2.msra.mxu0 %v723
    %855 = vmatprep.subr.mxu0 0.0
    %856 = vmatpush2.msra.mxu0 %v722
    %857 = vmatprep.subr.mxu0 0.0
    %858 = vmatpush2.msra.mxu0 %v721
    %859 = vmatprep.subr.mxu0 0.0
    %860 = vmatpush2.msra.mxu0 %v720
    %861 = vmatprep.subr.mxu0 0.0
    %862 = vmatpush2.msra.mxu0 %v719
    %863 = vmatprep.mubr.f32.mxu0 %v783
    %864 = vmatmul.mubr.f32.gmra.mxu0 %v751
    %v865 = vpop.f32.mrf.mxu0
    %v866 = vadd.f32 0.0, %v865
    %v867 = vpop.f32.mrf.mxu0
    %868 = vmatprep.mubr.f32.mxu0 %v784
    %869 = vmatmul.mubr.f32.gmra.mxu0 %v752
    %v870 = vpop.f32.mrf.mxu0
    %v871 = vadd.f32 0.0, %v870
    %v872 = vpop.f32.mrf.mxu0
    %873 = vdwg.mxu0
    %v874 = vmax.f32 %v866, -1.0
    %v875 = vmax.f32 %v871, -1.0
    %v876 = vmin.f32 %v874, 1.0
    %v877 = vmin.f32 %v875, 1.0
    %v878 = vmul.f32 %v876, 2.0
    %v879 = vmul.f32 %v877, 2.0
    %v880 = vsub.f32 2.0, %v878
    %v881 = vsub.f32 2.0, %v879
    %v882 = vrsqrt.pop %v880
    %v883 = vmul.f32 %v880, %v882
    %vm884 = vcmp.eq.f32.partialorder %v880, inf
    %v885 = vsel %vm884, %v880, %v883
    %vm886 = vcmp.eq.f32.partialorder %v880, 0.0
    %v887 = vand.u32 %v880, 2147483648
    %v888 = vsel %vm886, %v887, %v885
    %v889 = vrsqrt.pop %v881
    %v890 = vmul.f32 %v881, %v889
    %vm891 = vcmp.eq.f32.partialorder %v881, inf
    %v892 = vsel %vm891, %v881, %v890
    %vm893 = vcmp.eq.f32.partialorder %v881, 0.0
    %v894 = vand.u32 %v881, 2147483648
    %v895 = vsel %vm893, %v894, %v892
    %v896 = vld [vmem:[%s4] sm:$0xff]
    %vm897 = vcmask 130048
    %v899 = vsel %vm897, %v896, 0
    %901 = vmatprep.subr.mxu0 0.0
    %902 = vmatpush1.msra.mxu0 0.0
    %903 = vmatprep.subr.mxu0 0.0
    %904 = vmatpush1.msra.mxu0 0.0
    %905 = vmatprep.subr.mxu0 0.0
    %906 = vmatpush1.msra.mxu0 0.0
    %907 = vmatprep.subr.mxu0 0.0
    %908 = vmatpush1.msra.mxu0 0.0
    %909 = vmatprep.subr.mxu0 0.0
    %910 = vmatpush1.msra.mxu0 0.0
    %911 = vmatprep.subr.mxu0 0.0
    %912 = vmatpush1.msra.mxu0 0.0
    %913 = vmatprep.subr.mxu0 0.0
    %914 = vmatpush1.msra.mxu0 0.0
    %915 = vmatprep.subr.mxu0 0.0
    %916 = vmatpush1.msra.mxu0 0.0
    %917 = vmatprep.subr.mxu0 0.0
    %918 = vmatpush1.msra.mxu0 0.0
    %919 = vmatprep.subr.mxu0 0.0
    %920 = vmatpush1.msra.mxu0 0.0
    %921 = vmatprep.subr.mxu0 0.0
    %922 = vmatpush1.msra.mxu0 0.0
    %923 = vmatprep.subr.mxu0 0.0
    %924 = vmatpush1.msra.mxu0 0.0
    %925 = vmatprep.subr.mxu0 0.0
    %926 = vmatpush1.msra.mxu0 0.0
    %927 = vmatprep.subr.mxu0 0.0
    %928 = vmatpush1.msra.mxu0 0.0
    %929 = vmatprep.subr.mxu0 0.0
    %930 = vmatpush1.msra.mxu0 %v895
    %931 = vmatprep.subr.mxu0 0.0
    %932 = vmatpush1.msra.mxu0 %v888
    %933 = vmatprep.subr.mxu0 0.0
    %934 = vmatpush2.msra.mxu0 0.0
    %935 = vmatprep.subr.mxu0 0.0
    %936 = vmatpush2.msra.mxu0 0.0
    %937 = vmatprep.subr.mxu0 0.0
    %938 = vmatpush2.msra.mxu0 0.0
    %939 = vmatprep.subr.mxu0 0.0
    %940 = vmatpush2.msra.mxu0 0.0
    %941 = vmatprep.subr.mxu0 0.0
    %942 = vmatpush2.msra.mxu0 0.0
    %943 = vmatprep.subr.mxu0 0.0
    %944 = vmatpush2.msra.mxu0 0.0
    %945 = vmatprep.subr.mxu0 0.0
    %946 = vmatpush2.msra.mxu0 0.0
    %947 = vmatprep.subr.mxu0 0.0
    %948 = vmatpush2.msra.mxu0 0.0
    %949 = vmatprep.subr.mxu0 0.0
    %950 = vmatpush2.msra.mxu0 0.0
    %951 = vmatprep.subr.mxu0 0.0
    %952 = vmatpush2.msra.mxu0 0.0
    %953 = vmatprep.subr.mxu0 0.0
    %954 = vmatpush2.msra.mxu0 0.0
    %955 = vmatprep.subr.mxu0 0.0
    %956 = vmatpush2.msra.mxu0 0.0
    %957 = vmatprep.subr.mxu0 0.0
    %958 = vmatpush2.msra.mxu0 0.0
    %959 = vmatprep.subr.mxu0 0.0
    %960 = vmatpush2.msra.mxu0 0.0
    %961 = vmatprep.subr.mxu0 0.0
    %962 = vmatpush2.msra.mxu0 0.0
    %963 = vmatprep.subr.mxu0 0.0
    %964 = vmatpush2.msra.mxu0 0.0
    %965 = vmatprep.mubr.f32.mxu0 0.0
    %966 = vmatmul.mubr.f32.gmra.mxu0 %v899
    %v967 = vpop.f32.mrf.mxu0
    %v968 = vadd.f32 0.0, %v967
    %v969 = vpop.f32.mrf.mxu0
    %970 = vdwg.mxu0
    %v971 = vld [vmem:[%s5] sm:$0xff]
    %v972 = vld [vmem:[%s5 + $0x8] sm:$0xff]
    %v974 = vsel %vm897, %v968, 0
    %976 = vmatprep.subr.mxu0 0.0
    %977 = vmatpush1.msra.mxu0 0.0
    %978 = vmatprep.subr.mxu0 0.0
    %979 = vmatpush1.msra.mxu0 0.0
    %980 = vmatprep.subr.mxu0 0.0
    %981 = vmatpush1.msra.mxu0 0.0
    %982 = vmatprep.subr.mxu0 0.0
    %983 = vmatpush1.msra.mxu0 0.0
    %984 = vmatprep.subr.mxu0 0.0
    %985 = vmatpush1.msra.mxu0 0.0
    %986 = vmatprep.subr.mxu0 0.0
    %987 = vmatpush1.msra.mxu0 0.0
    %988 = vmatprep.subr.mxu0 0.0
    %989 = vmatpush1.msra.mxu0 0.0
    %990 = vmatprep.subr.mxu0 0.0
    %991 = vmatpush1.msra.mxu0 0.0
    %992 = vmatprep.subr.mxu0 0.0
    %993 = vmatpush1.msra.mxu0 0.0
    %994 = vmatprep.subr.mxu0 0.0
    %995 = vmatpush1.msra.mxu0 0.0
    %996 = vmatprep.subr.mxu0 0.0
    %997 = vmatpush1.msra.mxu0 0.0
    %998 = vmatprep.subr.mxu0 0.0
    %999 = vmatpush1.msra.mxu0 0.0
    %1000 = vmatprep.subr.mxu0 0.0
    %1001 = vmatpush1.msra.mxu0 0.0
    %1002 = vmatprep.subr.mxu0 0.0
    %1003 = vmatpush1.msra.mxu0 0.0
    %1004 = vmatprep.subr.mxu0 0.0
    %1005 = vmatpush1.msra.mxu0 %v972
    %1006 = vmatprep.subr.mxu0 0.0
    %1007 = vmatpush1.msra.mxu0 %v971
    %1008 = vmatprep.subr.mxu0 0.0
    %1009 = vmatpush2.msra.mxu0 0.0
    %1010 = vmatprep.subr.mxu0 0.0
    %1011 = vmatpush2.msra.mxu0 0.0
    %1012 = vmatprep.subr.mxu0 0.0
    %1013 = vmatpush2.msra.mxu0 0.0
    %1014 = vmatprep.subr.mxu0 0.0
    %1015 = vmatpush2.msra.mxu0 0.0
    %1016 = vmatprep.subr.mxu0 0.0
    %1017 = vmatpush2.msra.mxu0 0.0
    %1018 = vmatprep.subr.mxu0 0.0
    %1019 = vmatpush2.msra.mxu0 0.0
    %1020 = vmatprep.subr.mxu0 0.0
    %1021 = vmatpush2.msra.mxu0 0.0
    %1022 = vmatprep.subr.mxu0 0.0
    %1023 = vmatpush2.msra.mxu0 0.0
    %1024 = vmatprep.subr.mxu0 0.0
    %1025 = vmatpush2.msra.mxu0 0.0
    %1026 = vmatprep.subr.mxu0 0.0
    %1027 = vmatpush2.msra.mxu0 0.0
    %1028 = vmatprep.subr.mxu0 0.0
    %1029 = vmatpush2.msra.mxu0 0.0
    %1030 = vmatprep.subr.mxu0 0.0
    %1031 = vmatpush2.msra.mxu0 0.0
    %1032 = vmatprep.subr.mxu0 0.0
    %1033 = vmatpush2.msra.mxu0 0.0
    %1034 = vmatprep.subr.mxu0 0.0
    %1035 = vmatpush2.msra.mxu0 0.0
    %1036 = vmatprep.subr.mxu0 0.0
    %1037 = vmatpush2.msra.mxu0 0.0
    %1038 = vmatprep.subr.mxu0 0.0
    %1039 = vmatpush2.msra.mxu0 0.0
    %1040 = vmatprep.mubr.f32.mxu0 0.0
    %1041 = vmatmul.mubr.f32.gmra.mxu0 %v974
    %v1042 = vpop.f32.mrf.mxu0
    %v1043 = vadd.f32 0.0, %v1042
    %v1044 = vpop.f32.mrf.mxu0
    %1045 = vdwg.mxu0
    %vm1046 = vcmask 64512
    %v1047 = vsel %vm1046, %v1043, inf
    %1048 = vmin.xlane.f32.xlu0 %v1047
    %v1049 = vpop.xlane.xlu0 %1048
    %v1050 = vrot.slane %v1047, 4
    %v1051 = vmin.f32 %v1047, %v1050
    %v1052 = vrot.slane %v1051, 2
    %v1053 = vmin.f32 %v1051, %v1052
    %v1054 = vrot.slane %v1053, 1
    %v1055 = vmin.f32 %v1053, %v1054
    %vm1056 = vcmp.eq.f32.partialorder %v1043, %v1049
    %v1057 = vsel %vm1056, %v352, 8
    %v1058 = vsel %vm1046, %v1057, 2147483647
    %v1059 = vand.u32 %v1058, 65535
    %v1060 = vshra.s32 %v1058, 16
    %v1061 = vcvt.s32.f32 %v1059
    %v1062 = vcvt.s32.f32 %v1060
    %1063 = vmin.xlane.f32.xlu0 %v1062
    %v1064 = vpop.xlane.xlu0 %1063
    %vm1065 = vcmp.eq.f32.partialorder %v1062, %v1064
    %v1066 = vsel %vm1065, %v1061, inf
    %1067 = vmin.xlane.f32.xlu0 %v1066
    %v1068 = vpop.xlane.xlu0 %1067
    %v1069 = vcvt.f32.s32 %v1068
    %v1070 = vcvt.f32.s32 %v1064
    %v1071 = vshll.u32 %v1070, 16
    %v1072 = vadd.s32 %v1071, %v1069
    %vm1073 = vcmp.eq.f32.partialorder %v1043, %v1055
    %v1074 = vsel %vm1073, %v354, 8
    %v1075 = vsel %vm1046, %v1074, 2147483647
    %v1076 = vrot.slane %v1075, 4
    %vm1077 = vcmp.lt.s32.totalorder %v1075, %v1076
    %v1078 = vsel %vm1077, %v1075, %v1076
    %v1079 = vrot.slane %v1078, 2
    %vm1080 = vcmp.lt.s32.totalorder %v1078, %v1079
    %v1081 = vsel %vm1080, %v1078, %v1079
    %v1082 = vrot.slane %v1081, 1
    %vm1083 = vcmp.lt.s32.totalorder %v1081, %v1082
    %v1084 = vsel %vm1083, %v1081, %v1082
    %vm1085 = vcmp.eq.s32.totalorder %v352, %v1072
    %vm1086 = vcmp.eq.s32.totalorder %v354, %v1084
    %vm1087 = vmand %vm1085, %vm1086
    %vm1088 = vcmp.lt.f32.partialorder %v1043, 0.8
    %vm1089 = vmand %vm1087, %vm1088
    %v1090 = vsel %vm1089, 1, 0
    %v1091 = vcvt.s32.f32 %v1090
    %1092 = vst [vmem:[#allocation7] sm:$0xff] 1e+09
    %1093 = vst [vmem:[#allocation6] sm:$0xff] 0.0
    %1094 = vst.msk [vmem:[#allocation7] sm:$0xff] %vm1046, %v1043
    %1095 = vst.msk [vmem:[#allocation6] sm:$0xff] %vm1046, %v1091
    // Predicated region
    $region26: #{matching_forward.1} parent=1 // pred_check
      _
    $region27: #{matching_forward.1} parent=1 // pred_check_branch
      %1097 = sbr.rel (0) target = $region29
    $region28: #{matching_forward.1} parent=1 // pred_region
      %s1099 = ssub.s32 1024, 1024
      %1100 = vsyncadd [#allocation3], %s1099
      %s1101 = sshll.u32 [#allocation2], 4
      %s1102 = int_to_ptr.vmem [resolvable:$true] %s1101
      %1107 = dma.vmem_to_hbm [thread:$0]  %s1102, 1024, %s6, [#allocation3], 128, 128, 8
    $region29: #{matching_forward.1} parent=1 // pred_fallthru
      _
    // Predicated region
    $region30: #{matching_forward.1} parent=1 // pred_check
      _
    $region31: #{matching_forward.1} parent=1 // pred_check_branch
      %1109 = sbr.rel (0) target = $region33
    $region32: #{matching_forward.1} parent=1 // pred_region
      %s1111 = ssub.s32 1024, 1024
      %1112 = vsyncadd [#allocation5], %s1111
      %s1113 = sshll.u32 [#allocation4], 4
      %s1114 = int_to_ptr.vmem [resolvable:$true] %s1113
      %1119 = dma.vmem_to_hbm [thread:$0]  %s1114, 1024, %s7, [#allocation5], 128, 128, 8
    $region33: #{matching_forward.1} parent=1 // pred_fallthru
      _
    // Predicated region
    $region34: #{matching_forward.1} parent=1 // pred_check
      _
    $region35: #{matching_forward.1} parent=1 // pred_check_branch
      %1121 = sbr.rel (0) target = $region37
    $region36: #{matching_forward.1} parent=1 // pred_region
      %s1123 = ssub.s32 128, 128
      %1124 = vsyncadd [#allocation5], %s1123
      %s1126 = sshll.u32 [#allocation6], 4
      %s1127 = int_to_ptr.vmem [resolvable:$true] %s1126
      %1129 = dma.vmem_to_hbm [thread:$0]  %s1127, 128, %s8, [#allocation5]
    $region37: #{matching_forward.1} parent=1 // pred_fallthru
      _
    // Predicated region
    $region38: #{matching_forward.1} parent=1 // pred_check
      _
    $region39: #{matching_forward.1} parent=1 // pred_check_branch
      %1131 = sbr.rel (0) target = $region41
    $region40: #{matching_forward.1} parent=1 // pred_region
      %s1133 = ssub.s32 128, 128
      %1134 = vsyncadd [#allocation8], %s1133
      %s1136 = sshll.u32 [#allocation7], 4
      %s1137 = int_to_ptr.vmem [resolvable:$true] %s1136
      %1139 = dma.vmem_to_hbm [thread:$0]  %s1137, 128, %s9, [#allocation8]
    $region41: #{matching_forward.1} parent=1 // pred_fallthru
      _
    // Predicated region
    $region42: #{matching_forward.1} parent=1 // pred_check
      _
    $region43: #{matching_forward.1} parent=1 // pred_check_branch
      %1141 = sbr.rel (0) target = $region45
    $region44: #{matching_forward.1} parent=1 // pred_region
      %1142 = dma.done [#allocation3], 1024
    $region45: #{matching_forward.1} parent=1 // pred_fallthru
      _
    // Predicated region
    $region46: #{matching_forward.1} parent=1 // pred_check
      _
    $region47: #{matching_forward.1} parent=1 // pred_check_branch
      %1144 = sbr.rel (0) target = $region49
    $region48: #{matching_forward.1} parent=1 // pred_region
      %1145 = dma.done [#allocation5], 1024
    $region49: #{matching_forward.1} parent=1 // pred_fallthru
      _
    // Predicated region
    $region50: #{matching_forward.1} parent=1 // pred_check
      _
    $region51: #{matching_forward.1} parent=1 // pred_check_branch
      %1147 = sbr.rel (0) target = $region53
    $region52: #{matching_forward.1} parent=1 // pred_region
      %1148 = dma.done [#allocation5], 128
    $region53: #{matching_forward.1} parent=1 // pred_fallthru
      _
    // Predicated region
    $region54: #{matching_forward.1} parent=1 // pred_check
      _
    $region55: #{matching_forward.1} parent=1 // pred_check_branch
      %1150 = sbr.rel (0) target = $region57
    $region56: #{matching_forward.1} parent=1 // pred_region
      %1151 = dma.done [#allocation8], 128
    $region57: #{matching_forward.1} parent=1 // pred_fallthru
      _
    %1152 = vsyncpa [#allocation3], 1
    %1153 = vsyncpa [#allocation5], 1
    %1154 = vsyncpa [#allocation8], 1

</llo_original>
